<compile_context>
chip_gen: v7x
topology: tpu7x:2x2x1
jax: 0.10.0
libtpu: 0.0.40
codegen_flags: <defaults>
</compile_context>

<pallas_src>
import functools

import jax
import jax.numpy as jnp
from jax.experimental import pallas as pl
from jax.experimental.pallas import tpu as pltpu


def _round_up(x, m):
    return (x + m - 1) // m * m


def _pick_tc(T, max_tc=64, min_tc=8):
    """Time-block size: as large as possible, preferring divisors of T."""
    if T <= max_tc:
        return T
    for c in range(max_tc, min_tc - 1, -1):
        if T % c == 0:
            return c
    # No divisor in range: minimize padding waste, prefer larger blocks.
    return min(range(min_tc, max_tc + 1), key=lambda c: ((-T) % c, -c))


def _has_megacore():
    """True on chips with 2 TensorCores / megacore (batch split pays off)."""
    try:
        kind = jax.devices()[0].device_kind.lower()
    except Exception:
        return False
    return any(tag in kind for tag in ("v7", "v4", "v5p"))


def _vmem_cap_bytes():
    try:
        info = pltpu.get_tpu_info()
        cap = getattr(info, "vmem_capacity_bytes", None)
        if cap:
            return int(cap)
    except Exception:
        pass
    return 64 << 20


# ---------------------------------------------------------------------------
# Pallas kernel: one GRU layer (input projection + recurrence fused).
# ---------------------------------------------------------------------------
def _gru_layer_kernel(x_ref, wx_ref, whrz_ref, h0_ref, out_ref,
                      h_scratch, gx_scratch, *, H, Tc, unroll):
    """grid = (batch_blocks, T/Tc); time axis is sequential ("arbitrary").

    x_ref     : (Tc, Bb, Din)  raw layer input tile
    wx_ref    : (Din, 3H)      fused input weights [W_ir | W_iz | W_n]
    whrz_ref  : (H, 2H)        fused hidden weights [W_hr | W_hz]
    h0_ref    : (Bb, H)        initial hidden state for this batch block
    out_ref   : (Tc, Bb, H)    per-step hidden states (layer output)
    h_scratch : (Bb, H) f32    recurrent state, persists across time blocks
    gx_scratch: (Tc, Bb, 3H) f32  block-local precomputed x projections
    """
    t_blk = pl.program_id(1)

    @pl.when(t_blk == 0)
    def _init():
        h_scratch[...] = h0_ref[...].astype(jnp.float32)

    # Input projection for the whole time block: one big MXU matmul
    # (M = Tc*Bb is a good MXU shape, unlike the per-step M = Bb matmul).
    w_x = wx_ref[...]
    x_blk = x_ref[...].reshape(-1, x_ref.shape[-1]).astype(w_x.dtype)
    gx = jnp.dot(x_blk, w_x, preferred_element_type=jnp.float32)
    gx_scratch[...] = gx.reshape(gx_scratch.shape)

    w_hrz = whrz_ref[...]                       # resident fused [W_hr | W_hz]

    def step(i, h):
        gx_i = gx_scratch[i]                                     # (Bb, 3H) f32
        # single fused MXU matmul per step: h @ [W_hr | W_hz]
        hh = jnp.dot(h.astype(w_hrz.dtype), w_hrz,
                     preferred_element_type=jnp.float32)         # (Bb, 2H)
        sig = jax.nn.sigmoid(gx_i[:, :2 * H] + hh)               # one wide EUP op
        r = sig[:, :H]
        z = sig[:, H:]
        n = jnp.tanh(gx_i[:, 2 * H:] + r * h)
        h_next = n + z * (h - n)                 # == (1 - z) * n + z * h
        out_ref[i] = h_next.astype(out_ref.dtype)
        return h_next

    # TODO(synk): stage W_hrz once per block with pltpu.matmul_push_rhs and
    # drive the per-step matmuls via matmul_acc_lhs/matmul_pop to avoid the
    # per-step RHS re-push on the serial critical path.
    h_last = jax.lax.fori_loop(0, Tc, step, h_scratch[...], unroll=unroll)
    h_scratch[...] = h_last


def _gru_layer(x_seq, w_x, w_hrz, h0, *, H_pad, Tc, Bb, out_dtype):
    """Run one fused GRU layer over a padded sequence."""
    T_pad, B_pad, Din_pad = x_seq.shape
    num_t = T_pad // Tc
    num_b = B_pad // Bb

    # Bound vreg pressure in the unrolled time loop for large hidden sizes.
    if H_pad <= 256:
        unroll = True
    elif H_pad <= 512:
        unroll = 4
    else:
        unroll = 2

    act_sz = jnp.dtype(out_dtype).itemsize
    w_sz = jnp.dtype(w_x.dtype).itemsize
    x_blk = Tc * Bb * Din_pad * act_sz
    out_blk = Tc * Bb * H_pad * act_sz
    wx_blk = Din_pad * 3 * H_pad * w_sz
    whrz_blk = H_pad * 2 * H_pad * w_sz
    h0_blk = Bb * H_pad * act_sz
    gx_scr = Tc * Bb * 3 * H_pad * 4
    needed = (2 * (x_blk + out_blk + wx_blk + whrz_blk + h0_blk)
              + Bb * H_pad * 4 + 2 * gx_scr + (2 << 20))
    vmem_limit = int(min(max(needed, 32 << 20), _vmem_cap_bytes() * 3 // 4))

    kernel = functools.partial(_gru_layer_kernel, H=H_pad, Tc=Tc, unroll=unroll)

    return pl.pallas_call(
        kernel,
        out_shape=jax.ShapeDtypeStruct((T_pad, B_pad, H_pad), out_dtype),
        grid_spec=pltpu.PrefetchScalarGridSpec(
            num_scalar_prefetch=0,
            grid=(num_b, num_t),
            in_specs=[
                pl.BlockSpec((Tc, Bb, Din_pad), lambda b, t: (t, b, 0)),
                pl.BlockSpec((Din_pad, 3 * H_pad), lambda b, t: (0, 0)),
                pl.BlockSpec((H_pad, 2 * H_pad), lambda b, t: (0, 0)),
                pl.BlockSpec((Bb, H_pad), lambda b, t: (b, 0)),
            ],
            out_specs=pl.BlockSpec((Tc, Bb, H_pad), lambda b, t: (t, b, 0)),
            scratch_shapes=[
                pltpu.VMEM((Bb, H_pad), jnp.float32),
                pltpu.VMEM((Tc, Bb, 3 * H_pad), jnp.float32),
            ],
        ),
        compiler_params=pltpu.CompilerParams(
            dimension_semantics=("parallel", "arbitrary"),
            vmem_limit_bytes=vmem_limit,
        ),
    )(x_seq, w_x, w_hrz, h0)


# ---------------------------------------------------------------------------
# Weight preparation (zero-padding is exact for this cell).
# ---------------------------------------------------------------------------
def _fused_input_weight(w_in, w_n, H, H_pad, in_rows_pad):
    """[W_ir | W_iz | W_n], rows padded by in_rows_pad, cols H -> H_pad."""
    pads = ((0, in_rows_pad), (0, H_pad - H))
    return jnp.concatenate([
        jnp.pad(w_in[:, :H], pads),
        jnp.pad(w_in[:, H:2 * H], pads),
        jnp.pad(w_n, pads),
    ], axis=1)


def _fused_hidden_weight(w_hid, H, H_pad):
    """[W_hr | W_hz], zero-padded to (H_pad, 2*H_pad)."""
    pads = ((0, H_pad - H), (0, H_pad - H))
    return jnp.concatenate([
        jnp.pad(w_hid[:, :H], pads),
        jnp.pad(w_hid[:, H:2 * H], pads),
    ], axis=1)


# ---------------------------------------------------------------------------
# Full stacked-GRU forward (mirrors GRU.forward).
# ---------------------------------------------------------------------------
@functools.partial(jax.jit,
                   static_argnames=("n_layers", "hidden_size", "mxu_bf16"))
def gru_forward(x, params, n_layers, hidden_size, state=None, mxu_bf16=False):
    """x: (T, B, Din) time-major.  Returns (out, h_stack) like the module."""
    T, B, Din = x.shape
    H = hidden_size
    dtype = x.dtype
    # Optional bf16 MXU operands (f32 accumulate) for f32 activations.
    w_dtype = jnp.bfloat16 if mxu_bf16 else dtype

    # vreg-tile padding: 128 lanes, 8 sublanes (f32) / 16 (bf16/fp16).
    H_pad = _round_up(H, 128)
    Din_pad = _round_up(Din, 128)
    sublane = 8 if jnp.dtype(dtype).itemsize >= 4 else 16
    B_pad = _round_up(B, sublane)

    # 2-way batch split only where there are two TensorCores to use it.
    Bb = B_pad
    if _has_megacore() and B_pad % (2 * sublane) == 0:
        Bb = B_pad // 2

    # Time blocking (prefer Tc dividing T -> no dead padded timesteps).
    Tc = _pick_tc(T)
    T_pad = _round_up(T, Tc)

    if state is None:
        hs = [jnp.zeros((B_pad, H_pad), dtype) for _ in range(n_layers)]
    else:
        hs = [jnp.pad(state[l].astype(dtype),
                      ((0, B_pad - B), (0, H_pad - H)))
              for l in range(n_layers)]

    # Pad layer-0 input once; deeper layers consume padded activations
    # directly (weight rows are zero-padded instead).
    inp = jnp.pad(x, ((0, T_pad - T), (0, B_pad - B), (0, Din_pad - Din)))

    outs = []
    for layer in range(n_layers):
        p = params[layer]
        in_rows_pad = (Din_pad - Din) if layer == 0 else (H_pad - H)
        w_x = _fused_input_weight(p["w_in"], p["w_n"], H, H_pad,
                                  in_rows_pad).astype(w_dtype)
        w_hrz = _fused_hidden_weight(p["w_hid"], H, H_pad).astype(w_dtype)
        inp = _gru_layer(inp, w_x, w_hrz, hs[layer],
                         H_pad=H_pad, Tc=Tc, Bb=Bb, out_dtype=dtype)
        outs.append(inp)

    out = outs[-1][:T, :B, :H]
    h = jnp.stack([o[T - 1, :B, :H] for o in outs], axis=0)
    return out, h


# ---------------------------------------------------------------------------
# Parameter init (weights stored (in, out); matches the module math).
# ---------------------------------------------------------------------------
def init_gru_params(key, input_size, hidden_size, n_layers, dtype=jnp.float32):
    params = []
    for layer in range(n_layers):
        in_dim = input_size if layer == 0 else hidden_size
        key, k1, k2, k3 = jax.random.split(key, 4)
        scale_in = 1.0 / jnp.sqrt(in_dim)
        scale_h = 1.0 / jnp.sqrt(hidden_size)
        params.append(dict(
            w_in=(jax.random.uniform(k1, (in_dim, 3 * hidden_size),
                                     minval=-1, maxval=1) * scale_in).astype(dtype),
            w_hid=(jax.random.uniform(k2, (hidden_size, 3 * hidden_size),
                                      minval=-1, maxval=1) * scale_h).astype(dtype),
            w_n=(jax.random.uniform(k3, (in_dim, hidden_size),
                                    minval=-1, maxval=1) * scale_in).astype(dtype),
        ))
    return params


def gru_reference(x, params, n_layers, hidden_size):
    """Pure-JAX reference replicating the torch module step by step."""
    T, B = x.shape[:2]
    hs = [jnp.zeros((B, hidden_size), jnp.float32) for _ in range(n_layers)]
    outs = []
    for t in range(T):
        inp = x[t].astype(jnp.float32)
        for layer in range(n_layers):
            p = params[layer]
            h = hs[layer]
            gates = inp @ p["w_in"] + h @ p["w_hid"]
            r = jax.nn.sigmoid(gates[:, :hidden_size])
            z = jax.nn.sigmoid(gates[:, hidden_size:2 * hidden_size])
            n = jnp.tanh(inp @ p["w_n"] + r * h)
            h = (1 - z) * n + z * h
            hs[layer] = h
            inp = h
        outs.append(hs[-1])
    return jnp.stack(outs), jnp.stack(hs)


if __name__ == "__main__":
    n_steps, batch = 8, 4
    input_size, hidden_size, n_layers = 16, 32, 2

    key = jax.random.PRNGKey(0)
    k_x, k_p = jax.random.split(key)
    x = jax.random.normal(k_x, (n_steps, batch, input_size), dtype=jnp.float32)
    params = init_gru_params(k_p, input_size, hidden_size, n_layers)

    out, h = gru_forward(x, params, n_layers, hidden_size)
    out, h = jax.block_until_ready((out, h))

    out_ref, h_ref = gru_reference(x, params, n_layers, hidden_size)
    assert out.shape == (n_steps, batch, hidden_size)
    assert h.shape == (n_layers, batch, hidden_size)
    assert jnp.allclose(out, out_ref, atol=2e-4, rtol=2e-4), \
        float(jnp.max(jnp.abs(out - out_ref)))
    assert jnp.allclose(h, h_ref, atol=2e-4, rtol=2e-4), \
        float(jnp.max(jnp.abs(h - h_ref)))

    print("KERNEL_OK")
</pallas_src>

<mosaic_0001>
module attributes {stable_mosaic.version = 11 : i64} {
  func.func @_gru_layer_kernel(%arg0: i32, %arg1: i32, %arg2: memref<8x8x128xf32, #tpu.memory_space<vmem>>, %arg3: memref<128x384xf32, #tpu.memory_space<vmem>>, %arg4: memref<128x256xf32, #tpu.memory_space<vmem>>, %arg5: memref<8x128xf32, #tpu.memory_space<vmem>>, %arg6: memref<8x8x128xf32, #tpu.memory_space<vmem>>, %arg7: memref<8x128xf32, #tpu.memory_space<vmem>>, %arg8: memref<8x8x384xf32, #tpu.memory_space<vmem>>) attributes {dimension_semantics = [#tpu.dimension_semantics<parallel>, #tpu.dimension_semantics<arbitrary>], iteration_bounds = array<i64: 1, 1>, scalar_prefetch = 0 : i64, scratch_operands = 2 : i64, tpu.core_type = #tpu.core_type<tc>, window_params = [{transform_indices = @transform_0, window_bounds = array<i64: 8, 8, 128>}, {pipeline_mode = #tpu.pipeline_mode<synchronous>, transform_indices = @transform_1, window_bounds = array<i64: 128, 384>}, {pipeline_mode = #tpu.pipeline_mode<synchronous>, transform_indices = @transform_2, window_bounds = array<i64: 128, 256>}, {transform_indices = @transform_3, window_bounds = array<i64: 8, 128>}, {transform_indices = @transform_4, window_bounds = array<i64: 8, 8, 128>}]} {
    %c0_i32 = arith.constant 0 : i32
    %0 = arith.cmpi eq, %arg1, %c0_i32 : i32
    %1 = arith.extui %0 : i1 to i32
    %c0_i32_0 = arith.constant 0 : i32
    %2 = arith.cmpi ne, %1, %c0_i32_0 : i32
    scf.if %2 {
      %c0_63 = arith.constant 0 : index
      %c0_64 = arith.constant 0 : index
      %204 = vector.load %arg5[%c0_63, %c0_64] : memref<8x128xf32, #tpu.memory_space<vmem>>, vector<8x128xf32>
      %c0_65 = arith.constant 0 : index
      %c0_66 = arith.constant 0 : index
      %205 = vector.load %arg7[%c0_65, %c0_66] : memref<8x128xf32, #tpu.memory_space<vmem>>, vector<8x128xf32>
      tpu.vector_store %arg7[%c0_65, %c0_66], %204 {strides = array<i32>} : memref<8x128xf32, #tpu.memory_space<vmem>>, vector<8x128xf32>,
    } else {
    }
    %c0 = arith.constant 0 : index
    %c0_1 = arith.constant 0 : index
    %3 = vector.load %arg3[%c0, %c0_1] : memref<128x384xf32, #tpu.memory_space<vmem>>, vector<128x384xf32>
    %c0_2 = arith.constant 0 : index
    %c0_3 = arith.constant 0 : index
    %c0_4 = arith.constant 0 : index
    %4 = vector.load %arg2[%c0_2, %c0_3, %c0_4] : memref<8x8x128xf32, #tpu.memory_space<vmem>>, vector<8x8x128xf32>
    %5 = vector.shape_cast %4 : vector<8x8x128xf32> to vector<64x128xf32>
    %cst = arith.constant dense<0.000000e+00> : vector<64x384xf32>
    %6 = tpu.matmul %5, %3, %cst {dimension_numbers = #tpu.dot_dimension_numbers<[1], [0], [0], [1], [0, 0, 1, 1], [], []>} : vector<64x128xf32>, vector<128x384xf32>, vector<64x384xf32> -> vector<64x384xf32>
    %7 = vector.shape_cast %6 : vector<64x384xf32> to vector<8x8x384xf32>
    %c0_5 = arith.constant 0 : index
    %c0_6 = arith.constant 0 : index
    %c0_7 = arith.constant 0 : index
    %8 = vector.load %arg8[%c0_5, %c0_6, %c0_7] : memref<8x8x384xf32, #tpu.memory_space<vmem>>, vector<8x8x384xf32>
    tpu.vector_store %arg8[%c0_5, %c0_6, %c0_7], %7 {strides = array<i32>} : memref<8x8x384xf32, #tpu.memory_space<vmem>>, vector<8x8x384xf32>,
    %c0_8 = arith.constant 0 : index
    %c0_9 = arith.constant 0 : index
    %9 = vector.load %arg4[%c0_8, %c0_9] : memref<128x256xf32, #tpu.memory_space<vmem>>, vector<128x256xf32>
    %c0_10 = arith.constant 0 : index
    %c0_11 = arith.constant 0 : index
    %10 = vector.load %arg7[%c0_10, %c0_11] : memref<8x128xf32, #tpu.memory_space<vmem>>, vector<8x128xf32>
    %c0_i32_12 = arith.constant 0 : i32
    %11 = arith.index_cast %c0_i32_12 : i32 to index
    %c0_13 = arith.constant 0 : index
    %c0_14 = arith.constant 0 : index
    %12 = vector.load %arg8[%11, %c0_13, %c0_14] : memref<8x8x384xf32, #tpu.memory_space<vmem>>, vector<1x8x384xf32>
    %13 = vector.shape_cast %12 : vector<1x8x384xf32> to vector<8x384xf32>
    %cst_15 = arith.constant dense<0.000000e+00> : vector<8x256xf32>
    %14 = tpu.matmul %10, %9, %cst_15 {dimension_numbers = #tpu.dot_dimension_numbers<[1], [0], [0], [1], [0, 0, 1, 1], [], []>} : vector<8x128xf32>, vector<128x256xf32>, vector<8x256xf32> -> vector<8x256xf32>
    %15 = vector.extract_strided_slice %13 {offsets = [0, 0], sizes = [8, 256], strides = [1, 1]} : vector<8x384xf32> to vector<8x256xf32>
    %16 = arith.addf %15, %14 : vector<8x256xf32>
    %17 = arith.negf %16 : vector<8x256xf32>
    %18 = math.exp %17 : vector<8x256xf32>
    %cst_16 = arith.constant 1.000000e+00 : f32
    %19 = vector.broadcast %cst_16 : f32 to vector<8x256xf32>
    %20 = arith.addf %19, %18 : vector<8x256xf32>
    %21 = arith.divf %19, %20 : vector<8x256xf32>
    %22 = vector.extract_strided_slice %21 {offsets = [0, 0], sizes = [8, 128], strides = [1, 1]} : vector<8x256xf32> to vector<8x128xf32>
    %23 = vector.extract_strided_slice %21 {offsets = [0, 128], sizes = [8, 128], strides = [1, 1]} : vector<8x256xf32> to vector<8x128xf32>
    %24 = vector.extract_strided_slice %13 {offsets = [0, 256], sizes = [8, 128], strides = [1, 1]} : vector<8x384xf32> to vector<8x128xf32>
    %25 = arith.mulf %22, %10 : vector<8x128xf32>
    %26 = arith.addf %24, %25 : vector<8x128xf32>
    %27 = math.tanh %26 : vector<8x128xf32>
    %28 = arith.subf %10, %27 : vector<8x128xf32>
    %29 = arith.mulf %23, %28 : vector<8x128xf32>
    %30 = arith.addf %27, %29 : vector<8x128xf32>
    %31 = arith.index_cast %c0_i32_12 : i32 to index
    %c0_17 = arith.constant 0 : index
    %c0_18 = arith.constant 0 : index
    %32 = vector.load %arg6[%31, %c0_17, %c0_18] : memref<8x8x128xf32, #tpu.memory_space<vmem>>, vector<1x8x128xf32>
    %33 = vector.shape_cast %32 : vector<1x8x128xf32> to vector<8x128xf32>
    %34 = vector.shape_cast %30 : vector<8x128xf32> to vector<1x8x128xf32>
    tpu.vector_store %arg6[%31, %c0_17, %c0_18], %34 {strides = array<i32>} : memref<8x8x128xf32, #tpu.memory_space<vmem>>, vector<1x8x128xf32>,
    %c1_i32 = arith.constant 1 : i32
    %35 = arith.index_cast %c1_i32 : i32 to index
    %c0_19 = arith.constant 0 : index
    %c0_20 = arith.constant 0 : index
    %36 = vector.load %arg8[%35, %c0_19, %c0_20] : memref<8x8x384xf32, #tpu.memory_space<vmem>>, vector<1x8x384xf32>
    %37 = vector.shape_cast %36 : vector<1x8x384xf32> to vector<8x384xf32>
    %cst_21 = arith.constant dense<0.000000e+00> : vector<8x256xf32>
    %38 = tpu.matmul %30, %9, %cst_21 {dimension_numbers = #tpu.dot_dimension_numbers<[1], [0], [0], [1], [0, 0, 1, 1], [], []>} : vector<8x128xf32>, vector<128x256xf32>, vector<8x256xf32> -> vector<8x256xf32>
    %39 = vector.extract_strided_slice %37 {offsets = [0, 0], sizes = [8, 256], strides = [1, 1]} : vector<8x384xf32> to vector<8x256xf32>
    %40 = arith.addf %39, %38 : vector<8x256xf32>
    %41 = arith.negf %40 : vector<8x256xf32>
    %42 = math.exp %41 : vector<8x256xf32>
    %cst_22 = arith.constant 1.000000e+00 : f32
    %43 = vector.broadcast %cst_22 : f32 to vector<8x256xf32>
    %44 = arith.addf %43, %42 : vector<8x256xf32>
    %45 = arith.divf %43, %44 : vector<8x256xf32>
    %46 = vector.extract_strided_slice %45 {offsets = [0, 0], sizes = [8, 128], strides = [1, 1]} : vector<8x256xf32> to vector<8x128xf32>
    %47 = vector.extract_strided_slice %45 {offsets = [0, 128], sizes = [8, 128], strides = [1, 1]} : vector<8x256xf32> to vector<8x128xf32>
    %48 = vector.extract_strided_slice %37 {offsets = [0, 256], sizes = [8, 128], strides = [1, 1]} : vector<8x384xf32> to vector<8x128xf32>
    %49 = arith.mulf %46, %30 : vector<8x128xf32>
    %50 = arith.addf %48, %49 : vector<8x128xf32>
    %51 = math.tanh %50 : vector<8x128xf32>
    %52 = arith.subf %30, %51 : vector<8x128xf32>
    %53 = arith.mulf %47, %52 : vector<8x128xf32>
    %54 = arith.addf %51, %53 : vector<8x128xf32>
    %55 = arith.index_cast %c1_i32 : i32 to index
    %c0_23 = arith.constant 0 : index
    %c0_24 = arith.constant 0 : index
    %56 = vector.load %arg6[%55, %c0_23, %c0_24] : memref<8x8x128xf32, #tpu.memory_space<vmem>>, vector<1x8x128xf32>
    %57 = vector.shape_cast %56 : vector<1x8x128xf32> to vector<8x128xf32>
    %58 = vector.shape_cast %54 : vector<8x128xf32> to vector<1x8x128xf32>
    tpu.vector_store %arg6[%55, %c0_23, %c0_24], %58 {strides = array<i32>} : memref<8x8x128xf32, #tpu.memory_space<vmem>>, vector<1x8x128xf32>,
    %c2_i32 = arith.constant 2 : i32
    %59 = arith.index_cast %c2_i32 : i32 to index
    %c0_25 = arith.constant 0 : index
    %c0_26 = arith.constant 0 : index
    %60 = vector.load %arg8[%59, %c0_25, %c0_26] : memref<8x8x384xf32, #tpu.memory_space<vmem>>, vector<1x8x384xf32>
    %61 = vector.shape_cast %60 : vector<1x8x384xf32> to vector<8x384xf32>
    %cst_27 = arith.constant dense<0.000000e+00> : vector<8x256xf32>
    %62 = tpu.matmul %54, %9, %cst_27 {dimension_numbers = #tpu.dot_dimension_numbers<[1], [0], [0], [1], [0, 0, 1, 1], [], []>} : vector<8x128xf32>, vector<128x256xf32>, vector<8x256xf32> -> vector<8x256xf32>
    %63 = vector.extract_strided_slice %61 {offsets = [0, 0], sizes = [8, 256], strides = [1, 1]} : vector<8x384xf32> to vector<8x256xf32>
    %64 = arith.addf %63, %62 : vector<8x256xf32>
    %65 = arith.negf %64 : vector<8x256xf32>
    %66 = math.exp %65 : vector<8x256xf32>
    %cst_28 = arith.constant 1.000000e+00 : f32
    %67 = vector.broadcast %cst_28 : f32 to vector<8x256xf32>
    %68 = arith.addf %67, %66 : vector<8x256xf32>
    %69 = arith.divf %67, %68 : vector<8x256xf32>
    %70 = vector.extract_strided_slice %69 {offsets = [0, 0], sizes = [8, 128], strides = [1, 1]} : vector<8x256xf32> to vector<8x128xf32>
    %71 = vector.extract_strided_slice %69 {offsets = [0, 128], sizes = [8, 128], strides = [1, 1]} : vector<8x256xf32> to vector<8x128xf32>
    %72 = vector.extract_strided_slice %61 {offsets = [0, 256], sizes = [8, 128], strides = [1, 1]} : vector<8x384xf32> to vector<8x128xf32>
    %73 = arith.mulf %70, %54 : vector<8x128xf32>
    %74 = arith.addf %72, %73 : vector<8x128xf32>
    %75 = math.tanh %74 : vector<8x128xf32>
    %76 = arith.subf %54, %75 : vector<8x128xf32>
    %77 = arith.mulf %71, %76 : vector<8x128xf32>
    %78 = arith.addf %75, %77 : vector<8x128xf32>
    %79 = arith.index_cast %c2_i32 : i32 to index
    %c0_29 = arith.constant 0 : index
    %c0_30 = arith.constant 0 : index
    %80 = vector.load %arg6[%79, %c0_29, %c0_30] : memref<8x8x128xf32, #tpu.memory_space<vmem>>, vector<1x8x128xf32>
    %81 = vector.shape_cast %80 : vector<1x8x128xf32> to vector<8x128xf32>
    %82 = vector.shape_cast %78 : vector<8x128xf32> to vector<1x8x128xf32>
    tpu.vector_store %arg6[%79, %c0_29, %c0_30], %82 {strides = array<i32>} : memref<8x8x128xf32, #tpu.memory_space<vmem>>, vector<1x8x128xf32>,
    %c3_i32 = arith.constant 3 : i32
    %83 = arith.index_cast %c3_i32 : i32 to index
    %c0_31 = arith.constant 0 : index
    %c0_32 = arith.constant 0 : index
    %84 = vector.load %arg8[%83, %c0_31, %c0_32] : memref<8x8x384xf32, #tpu.memory_space<vmem>>, vector<1x8x384xf32>
    %85 = vector.shape_cast %84 : vector<1x8x384xf32> to vector<8x384xf32>
    %cst_33 = arith.constant dense<0.000000e+00> : vector<8x256xf32>
    %86 = tpu.matmul %78, %9, %cst_33 {dimension_numbers = #tpu.dot_dimension_numbers<[1], [0], [0], [1], [0, 0, 1, 1], [], []>} : vector<8x128xf32>, vector<128x256xf32>, vector<8x256xf32> -> vector<8x256xf32>
    %87 = vector.extract_strided_slice %85 {offsets = [0, 0], sizes = [8, 256], strides = [1, 1]} : vector<8x384xf32> to vector<8x256xf32>
    %88 = arith.addf %87, %86 : vector<8x256xf32>
    %89 = arith.negf %88 : vector<8x256xf32>
    %90 = math.exp %89 : vector<8x256xf32>
    %cst_34 = arith.constant 1.000000e+00 : f32
    %91 = vector.broadcast %cst_34 : f32 to vector<8x256xf32>
    %92 = arith.addf %91, %90 : vector<8x256xf32>
    %93 = arith.divf %91, %92 : vector<8x256xf32>
    %94 = vector.extract_strided_slice %93 {offsets = [0, 0], sizes = [8, 128], strides = [1, 1]} : vector<8x256xf32> to vector<8x128xf32>
    %95 = vector.extract_strided_slice %93 {offsets = [0, 128], sizes = [8, 128], strides = [1, 1]} : vector<8x256xf32> to vector<8x128xf32>
    %96 = vector.extract_strided_slice %85 {offsets = [0, 256], sizes = [8, 128], strides = [1, 1]} : vector<8x384xf32> to vector<8x128xf32>
    %97 = arith.mulf %94, %78 : vector<8x128xf32>
    %98 = arith.addf %96, %97 : vector<8x128xf32>
    %99 = math.tanh %98 : vector<8x128xf32>
    %100 = arith.subf %78, %99 : vector<8x128xf32>
    %101 = arith.mulf %95, %100 : vector<8x128xf32>
    %102 = arith.addf %99, %101 : vector<8x128xf32>
    %103 = arith.index_cast %c3_i32 : i32 to index
    %c0_35 = arith.constant 0 : index
    %c0_36 = arith.constant 0 : index
    %104 = vector.load %arg6[%103, %c0_35, %c0_36] : memref<8x8x128xf32, #tpu.memory_space<vmem>>, vector<1x8x128xf32>
    %105 = vector.shape_cast %104 : vector<1x8x128xf32> to vector<8x128xf32>
    %106 = vector.shape_cast %102 : vector<8x128xf32> to vector<1x8x128xf32>
    tpu.vector_store %arg6[%103, %c0_35, %c0_36], %106 {strides = array<i32>} : memref<8x8x128xf32, #tpu.memory_space<vmem>>, vector<1x8x128xf32>,
    %c4_i32 = arith.constant 4 : i32
    %107 = arith.index_cast %c4_i32 : i32 to index
    %c0_37 = arith.constant 0 : index
    %c0_38 = arith.constant 0 : index
    %108 = vector.load %arg8[%107, %c0_37, %c0_38] : memref<8x8x384xf32, #tpu.memory_space<vmem>>, vector<1x8x384xf32>
    %109 = vector.shape_cast %108 : vector<1x8x384xf32> to vector<8x384xf32>
    %cst_39 = arith.constant dense<0.000000e+00> : vector<8x256xf32>
    %110 = tpu.matmul %102, %9, %cst_39 {dimension_numbers = #tpu.dot_dimension_numbers<[1], [0], [0], [1], [0, 0, 1, 1], [], []>} : vector<8x128xf32>, vector<128x256xf32>, vector<8x256xf32> -> vector<8x256xf32>
    %111 = vector.extract_strided_slice %109 {offsets = [0, 0], sizes = [8, 256], strides = [1, 1]} : vector<8x384xf32> to vector<8x256xf32>
    %112 = arith.addf %111, %110 : vector<8x256xf32>
    %113 = arith.negf %112 : vector<8x256xf32>
    %114 = math.exp %113 : vector<8x256xf32>
    %cst_40 = arith.constant 1.000000e+00 : f32
    %115 = vector.broadcast %cst_40 : f32 to vector<8x256xf32>
    %116 = arith.addf %115, %114 : vector<8x256xf32>
    %117 = arith.divf %115, %116 : vector<8x256xf32>
    %118 = vector.extract_strided_slice %117 {offsets = [0, 0], sizes = [8, 128], strides = [1, 1]} : vector<8x256xf32> to vector<8x128xf32>
    %119 = vector.extract_strided_slice %117 {offsets = [0, 128], sizes = [8, 128], strides = [1, 1]} : vector<8x256xf32> to vector<8x128xf32>
    %120 = vector.extract_strided_slice %109 {offsets = [0, 256], sizes = [8, 128], strides = [1, 1]} : vector<8x384xf32> to vector<8x128xf32>
    %121 = arith.mulf %118, %102 : vector<8x128xf32>
    %122 = arith.addf %120, %121 : vector<8x128xf32>
    %123 = math.tanh %122 : vector<8x128xf32>
    %124 = arith.subf %102, %123 : vector<8x128xf32>
    %125 = arith.mulf %119, %124 : vector<8x128xf32>
    %126 = arith.addf %123, %125 : vector<8x128xf32>
    %127 = arith.index_cast %c4_i32 : i32 to index
    %c0_41 = arith.constant 0 : index
    %c0_42 = arith.constant 0 : index
    %128 = vector.load %arg6[%127, %c0_41, %c0_42] : memref<8x8x128xf32, #tpu.memory_space<vmem>>, vector<1x8x128xf32>
    %129 = vector.shape_cast %128 : vector<1x8x128xf32> to vector<8x128xf32>
    %130 = vector.shape_cast %126 : vector<8x128xf32> to vector<1x8x128xf32>
    tpu.vector_store %arg6[%127, %c0_41, %c0_42], %130 {strides = array<i32>} : memref<8x8x128xf32, #tpu.memory_space<vmem>>, vector<1x8x128xf32>,
    %c5_i32 = arith.constant 5 : i32
    %131 = arith.index_cast %c5_i32 : i32 to index
    %c0_43 = arith.constant 0 : index
    %c0_44 = arith.constant 0 : index
    %132 = vector.load %arg8[%131, %c0_43, %c0_44] : memref<8x8x384xf32, #tpu.memory_space<vmem>>, vector<1x8x384xf32>
    %133 = vector.shape_cast %132 : vector<1x8x384xf32> to vector<8x384xf32>
    %cst_45 = arith.constant dense<0.000000e+00> : vector<8x256xf32>
    %134 = tpu.matmul %126, %9, %cst_45 {dimension_numbers = #tpu.dot_dimension_numbers<[1], [0], [0], [1], [0, 0, 1, 1], [], []>} : vector<8x128xf32>, vector<128x256xf32>, vector<8x256xf32> -> vector<8x256xf32>
    %135 = vector.extract_strided_slice %133 {offsets = [0, 0], sizes = [8, 256], strides = [1, 1]} : vector<8x384xf32> to vector<8x256xf32>
    %136 = arith.addf %135, %134 : vector<8x256xf32>
    %137 = arith.negf %136 : vector<8x256xf32>
    %138 = math.exp %137 : vector<8x256xf32>
    %cst_46 = arith.constant 1.000000e+00 : f32
    %139 = vector.broadcast %cst_46 : f32 to vector<8x256xf32>
    %140 = arith.addf %139, %138 : vector<8x256xf32>
    %141 = arith.divf %139, %140 : vector<8x256xf32>
    %142 = vector.extract_strided_slice %141 {offsets = [0, 0], sizes = [8, 128], strides = [1, 1]} : vector<8x256xf32> to vector<8x128xf32>
    %143 = vector.extract_strided_slice %141 {offsets = [0, 128], sizes = [8, 128], strides = [1, 1]} : vector<8x256xf32> to vector<8x128xf32>
    %144 = vector.extract_strided_slice %133 {offsets = [0, 256], sizes = [8, 128], strides = [1, 1]} : vector<8x384xf32> to vector<8x128xf32>
    %145 = arith.mulf %142, %126 : vector<8x128xf32>
    %146 = arith.addf %144, %145 : vector<8x128xf32>
    %147 = math.tanh %146 : vector<8x128xf32>
    %148 = arith.subf %126, %147 : vector<8x128xf32>
    %149 = arith.mulf %143, %148 : vector<8x128xf32>
    %150 = arith.addf %147, %149 : vector<8x128xf32>
    %151 = arith.index_cast %c5_i32 : i32 to index
    %c0_47 = arith.constant 0 : index
    %c0_48 = arith.constant 0 : index
    %152 = vector.load %arg6[%151, %c0_47, %c0_48] : memref<8x8x128xf32, #tpu.memory_space<vmem>>, vector<1x8x128xf32>
    %153 = vector.shape_cast %152 : vector<1x8x128xf32> to vector<8x128xf32>
    %154 = vector.shape_cast %150 : vector<8x128xf32> to vector<1x8x128xf32>
    tpu.vector_store %arg6[%151, %c0_47, %c0_48], %154 {strides = array<i32>} : memref<8x8x128xf32, #tpu.memory_space<vmem>>, vector<1x8x128xf32>,
    %c6_i32 = arith.constant 6 : i32
    %155 = arith.index_cast %c6_i32 : i32 to index
    %c0_49 = arith.constant 0 : index
    %c0_50 = arith.constant 0 : index
    %156 = vector.load %arg8[%155, %c0_49, %c0_50] : memref<8x8x384xf32, #tpu.memory_space<vmem>>, vector<1x8x384xf32>
    %157 = vector.shape_cast %156 : vector<1x8x384xf32> to vector<8x384xf32>
    %cst_51 = arith.constant dense<0.000000e+00> : vector<8x256xf32>
    %158 = tpu.matmul %150, %9, %cst_51 {dimension_numbers = #tpu.dot_dimension_numbers<[1], [0], [0], [1], [0, 0, 1, 1], [], []>} : vector<8x128xf32>, vector<128x256xf32>, vector<8x256xf32> -> vector<8x256xf32>
    %159 = vector.extract_strided_slice %157 {offsets = [0, 0], sizes = [8, 256], strides = [1, 1]} : vector<8x384xf32> to vector<8x256xf32>
    %160 = arith.addf %159, %158 : vector<8x256xf32>
    %161 = arith.negf %160 : vector<8x256xf32>
    %162 = math.exp %161 : vector<8x256xf32>
    %cst_52 = arith.constant 1.000000e+00 : f32
    %163 = vector.broadcast %cst_52 : f32 to vector<8x256xf32>
    %164 = arith.addf %163, %162 : vector<8x256xf32>
    %165 = arith.divf %163, %164 : vector<8x256xf32>
    %166 = vector.extract_strided_slice %165 {offsets = [0, 0], sizes = [8, 128], strides = [1, 1]} : vector<8x256xf32> to vector<8x128xf32>
    %167 = vector.extract_strided_slice %165 {offsets = [0, 128], sizes = [8, 128], strides = [1, 1]} : vector<8x256xf32> to vector<8x128xf32>
    %168 = vector.extract_strided_slice %157 {offsets = [0, 256], sizes = [8, 128], strides = [1, 1]} : vector<8x384xf32> to vector<8x128xf32>
    %169 = arith.mulf %166, %150 : vector<8x128xf32>
    %170 = arith.addf %168, %169 : vector<8x128xf32>
    %171 = math.tanh %170 : vector<8x128xf32>
    %172 = arith.subf %150, %171 : vector<8x128xf32>
    %173 = arith.mulf %167, %172 : vector<8x128xf32>
    %174 = arith.addf %171, %173 : vector<8x128xf32>
    %175 = arith.index_cast %c6_i32 : i32 to index
    %c0_53 = arith.constant 0 : index
    %c0_54 = arith.constant 0 : index
    %176 = vector.load %arg6[%175, %c0_53, %c0_54] : memref<8x8x128xf32, #tpu.memory_space<vmem>>, vector<1x8x128xf32>
    %177 = vector.shape_cast %176 : vector<1x8x128xf32> to vector<8x128xf32>
    %178 = vector.shape_cast %174 : vector<8x128xf32> to vector<1x8x128xf32>
    tpu.vector_store %arg6[%175, %c0_53, %c0_54], %178 {strides = array<i32>} : memref<8x8x128xf32, #tpu.memory_space<vmem>>, vector<1x8x128xf32>,
    %c7_i32 = arith.constant 7 : i32
    %179 = arith.index_cast %c7_i32 : i32 to index
    %c0_55 = arith.constant 0 : index
    %c0_56 = arith.constant 0 : index
    %180 = vector.load %arg8[%179, %c0_55, %c0_56] : memref<8x8x384xf32, #tpu.memory_space<vmem>>, vector<1x8x384xf32>
    %181 = vector.shape_cast %180 : vector<1x8x384xf32> to vector<8x384xf32>
    %cst_57 = arith.constant dense<0.000000e+00> : vector<8x256xf32>
    %182 = tpu.matmul %174, %9, %cst_57 {dimension_numbers = #tpu.dot_dimension_numbers<[1], [0], [0], [1], [0, 0, 1, 1], [], []>} : vector<8x128xf32>, vector<128x256xf32>, vector<8x256xf32> -> vector<8x256xf32>
    %183 = vector.extract_strided_slice %181 {offsets = [0, 0], sizes = [8, 256], strides = [1, 1]} : vector<8x384xf32> to vector<8x256xf32>
    %184 = arith.addf %183, %182 : vector<8x256xf32>
    %185 = arith.negf %184 : vector<8x256xf32>
    %186 = math.exp %185 : vector<8x256xf32>
    %cst_58 = arith.constant 1.000000e+00 : f32
    %187 = vector.broadcast %cst_58 : f32 to vector<8x256xf32>
    %188 = arith.addf %187, %186 : vector<8x256xf32>
    %189 = arith.divf %187, %188 : vector<8x256xf32>
    %190 = vector.extract_strided_slice %189 {offsets = [0, 0], sizes = [8, 128], strides = [1, 1]} : vector<8x256xf32> to vector<8x128xf32>
    %191 = vector.extract_strided_slice %189 {offsets = [0, 128], sizes = [8, 128], strides = [1, 1]} : vector<8x256xf32> to vector<8x128xf32>
    %192 = vector.extract_strided_slice %181 {offsets = [0, 256], sizes = [8, 128], strides = [1, 1]} : vector<8x384xf32> to vector<8x128xf32>
    %193 = arith.mulf %190, %174 : vector<8x128xf32>
    %194 = arith.addf %192, %193 : vector<8x128xf32>
    %195 = math.tanh %194 : vector<8x128xf32>
    %196 = arith.subf %174, %195 : vector<8x128xf32>
    %197 = arith.mulf %191, %196 : vector<8x128xf32>
    %198 = arith.addf %195, %197 : vector<8x128xf32>
    %199 = arith.index_cast %c7_i32 : i32 to index
    %c0_59 = arith.constant 0 : index
    %c0_60 = arith.constant 0 : index
    %200 = vector.load %arg6[%199, %c0_59, %c0_60] : memref<8x8x128xf32, #tpu.memory_space<vmem>>, vector<1x8x128xf32>
    %201 = vector.shape_cast %200 : vector<1x8x128xf32> to vector<8x128xf32>
    %202 = vector.shape_cast %198 : vector<8x128xf32> to vector<1x8x128xf32>
    tpu.vector_store %arg6[%199, %c0_59, %c0_60], %202 {strides = array<i32>} : memref<8x8x128xf32, #tpu.memory_space<vmem>>, vector<1x8x128xf32>,
    %c8_i32 = arith.constant 8 : i32
    %c0_61 = arith.constant 0 : index
    %c0_62 = arith.constant 0 : index
    %203 = vector.load %arg7[%c0_61, %c0_62] : memref<8x128xf32, #tpu.memory_space<vmem>>, vector<8x128xf32>
    tpu.vector_store %arg7[%c0_61, %c0_62], %198 {strides = array<i32>} : memref<8x128xf32, #tpu.memory_space<vmem>>, vector<8x128xf32>,
    return
  }
  func.func @transform_0(%arg0: i32, %arg1: i32) -> (i32, i32, i32) {
    %c0_i32 = arith.constant 0 : i32
    %c0_i32_0 = arith.constant 0 : i32
    return %arg1, %arg0, %c0_i32 : i32, i32, i32
  }
  func.func @transform_1(%arg0: i32, %arg1: i32) -> (i32, i32) {
    %c0_i32 = arith.constant 0 : i32
    %c0_i32_0 = arith.constant 0 : i32
    %c0_i32_1 = arith.constant 0 : i32
    return %c0_i32, %c0_i32_0 : i32, i32
  }
  func.func @transform_2(%arg0: i32, %arg1: i32) -> (i32, i32) {
    %c0_i32 = arith.constant 0 : i32
    %c0_i32_0 = arith.constant 0 : i32
    %c0_i32_1 = arith.constant 0 : i32
    return %c0_i32, %c0_i32_0 : i32, i32
  }
  func.func @transform_3(%arg0: i32, %arg1: i32) -> (i32, i32) {
    %c0_i32 = arith.constant 0 : i32
    %c0_i32_0 = arith.constant 0 : i32
    return %arg0, %c0_i32 : i32, i32
  }
  func.func @transform_4(%arg0: i32, %arg1: i32) -> (i32, i32, i32) {
    %c0_i32 = arith.constant 0 : i32
    %c0_i32_0 = arith.constant 0 : i32
    return %arg1, %arg0, %c0_i32 : i32, i32, i32
  }
}

</mosaic_0001>

<llo_original>
// kernel: gru_forward.2
$region0: #{gru_forward.2}
  #allocation0 [shape = 'u32[]', space=smem, size = 0x4, offset = 0x4, fixed_abs, tag = 'smem constant byte address 0x4 - core index']
  #allocation1 [shape = 'u32[144,128]{1,0:T(1,128)}', space=vmem, size = 0x12000, scoped, tag = 'internal scratch']
  #allocation2 [shape = 'f32[8,128]{1,0:T(8,128)}', space=vmem, size = 0x1000, scoped, tag = 'scratch operand']
  #allocation3 [shape = 'f32[8,8,384]{2,1,0:T(8,128)}', space=vmem, size = 0x18000, scoped, tag = 'scratch operand']
  %s0 = inlined_call_operand.vmem [shape: f32[8,8,128], index: 0, kind: input, shape index: {}]
  %s1 = inlined_call_operand.vmem [shape: f32[128,384], index: 1, kind: input, shape index: {}]
  %s2 = inlined_call_operand.vmem [shape: f32[128,256], index: 2, kind: input, shape index: {}]
  %s3 = inlined_call_operand.vmem [shape: f32[8,128], index: 3, kind: input, shape index: {}]
  %s4 = inlined_call_operand.vmem [shape: f32[8,8,128], index: 4, kind: output, shape index: {}]
  %s5 = sld [smem:[#allocation0]]
  $region30: #{gru_forward.2} parent=0
    _
  %s7 = ssub.s32 1, %s5
  %s8 = scalar_select 0, %s7, %s5
  // Predicated region
  $region2: #{gru_forward.2} parent=0 // pred_check
    _
  $region3: #{gru_forward.2} parent=0 // pred_check_branch
    %10 = sbr.rel (0) target = $region5
  $region4: #{gru_forward.2} parent=0 // pred_region
    _
  $region5: #{gru_forward.2} parent=0 // pred_fallthru
    _
  // Predicated region
  $region6: #{gru_forward.2} parent=0 // pred_check
    _
  $region7: #{gru_forward.2} parent=0 // pred_check_branch
    %12 = sbr.rel (0) target = $region9
  $region8: #{gru_forward.2} parent=0 // pred_region
    _
  $region9: #{gru_forward.2} parent=0 // pred_fallthru
    _
  // Predicated region
  $region10: #{gru_forward.2} parent=0 // pred_check
    _
  $region11: #{gru_forward.2} parent=0 // pred_check_branch
    %14 = sbr.rel (0) target = $region13
  $region12: #{gru_forward.2} parent=0 // pred_region
    _
  $region13: #{gru_forward.2} parent=0 // pred_fallthru
    _
  // Predicated region
  $region14: #{gru_forward.2} parent=0 // pred_check
    _
  $region15: #{gru_forward.2} parent=0 // pred_check_branch
    %16 = sbr.rel (0) target = $region17
  $region16: #{gru_forward.2} parent=0 // pred_region
    _
  $region17: #{gru_forward.2} parent=0 // pred_fallthru
    _
  %p17 = scmp.eq.s32.totalorder 0, 0
  // Predicated region
  $region18: #{gru_forward.2} parent=0 // pred_check
    %p18 = pneg %p17
  $region19: #{gru_forward.2} parent=0 // pred_check_branch
    %20 = sbr.rel (%p18) target = $region21
  $region20: #{gru_forward.2} parent=0 // pred_region
    %v21 = vld [vmem:[%s3] sm:$0xff]
    %22 = vst [vmem:[#allocation2] sm:$0xff] %v21
  $region21: #{gru_forward.2} parent=0 // pred_fallthru
    _
  %v23 = vld [vmem:[%s1] sm:$0xff]
  %v24 = vld [vmem:[%s1 + $0x8] sm:$0xff]
  %v25 = vld [vmem:[%s1 + $0x10] sm:$0xff]
  %v26 = vld [vmem:[%s1 + $0x18] sm:$0xff]
  %v27 = vld [vmem:[%s1 + $0x20] sm:$0xff]
  %v28 = vld [vmem:[%s1 + $0x28] sm:$0xff]
  %v29 = vld [vmem:[%s1 + $0x30] sm:$0xff]
  %v30 = vld [vmem:[%s1 + $0x38] sm:$0xff]
  %v31 = vld [vmem:[%s1 + $0x40] sm:$0xff]
  %v32 = vld [vmem:[%s1 + $0x48] sm:$0xff]
  %v33 = vld [vmem:[%s1 + $0x50] sm:$0xff]
  %v34 = vld [vmem:[%s1 + $0x58] sm:$0xff]
  %v35 = vld [vmem:[%s1 + $0x60] sm:$0xff]
  %v36 = vld [vmem:[%s1 + $0x68] sm:$0xff]
  %v37 = vld [vmem:[%s1 + $0x70] sm:$0xff]
  %v38 = vld [vmem:[%s1 + $0x78] sm:$0xff]
  %v39 = vld [vmem:[%s1 + $0x80] sm:$0xff]
  %v40 = vld [vmem:[%s1 + $0x88] sm:$0xff]
  %v41 = vld [vmem:[%s1 + $0x90] sm:$0xff]
  %v42 = vld [vmem:[%s1 + $0x98] sm:$0xff]
  %v43 = vld [vmem:[%s1 + $0xa0] sm:$0xff]
  %v44 = vld [vmem:[%s1 + $0xa8] sm:$0xff]
  %v45 = vld [vmem:[%s1 + $0xb0] sm:$0xff]
  %v46 = vld [vmem:[%s1 + $0xb8] sm:$0xff]
  %v47 = vld [vmem:[%s1 + $0xc0] sm:$0xff]
  %v48 = vld [vmem:[%s1 + $0xc8] sm:$0xff]
  %v49 = vld [vmem:[%s1 + $0xd0] sm:$0xff]
  %v50 = vld [vmem:[%s1 + $0xd8] sm:$0xff]
  %v51 = vld [vmem:[%s1 + $0xe0] sm:$0xff]
  %v52 = vld [vmem:[%s1 + $0xe8] sm:$0xff]
  %v53 = vld [vmem:[%s1 + $0xf0] sm:$0xff]
  %v54 = vld [vmem:[%s1 + $0xf8] sm:$0xff]
  %v55 = vld [vmem:[%s1 + $0x100] sm:$0xff]
  %v56 = vld [vmem:[%s1 + $0x108] sm:$0xff]
  %v57 = vld [vmem:[%s1 + $0x110] sm:$0xff]
  %v58 = vld [vmem:[%s1 + $0x118] sm:$0xff]
  %v59 = vld [vmem:[%s1 + $0x120] sm:$0xff]
  %v60 = vld [vmem:[%s1 + $0x128] sm:$0xff]
  %v61 = vld [vmem:[%s1 + $0x130] sm:$0xff]
  %v62 = vld [vmem:[%s1 + $0x138] sm:$0xff]
  %v63 = vld [vmem:[%s1 + $0x140] sm:$0xff]
  %v64 = vld [vmem:[%s1 + $0x148] sm:$0xff]
  %v65 = vld [vmem:[%s1 + $0x150] sm:$0xff]
  %v66 = vld [vmem:[%s1 + $0x158] sm:$0xff]
  %v67 = vld [vmem:[%s1 + $0x160] sm:$0xff]
  %v68 = vld [vmem:[%s1 + $0x168] sm:$0xff]
  %v69 = vld [vmem:[%s1 + $0x170] sm:$0xff]
  %v70 = vld [vmem:[%s1 + $0x178] sm:$0xff]
  %v71 = vld [vmem:[%s0] sm:$0xff]
  %v72 = vld [vmem:[%s0 + $0x8] sm:$0xff]
  %v73 = vld [vmem:[%s0 + $0x10] sm:$0xff]
  %v74 = vld [vmem:[%s0 + $0x18] sm:$0xff]
  %v75 = vld [vmem:[%s0 + $0x20] sm:$0xff]
  %v76 = vld [vmem:[%s0 + $0x28] sm:$0xff]
  %v77 = vld [vmem:[%s0 + $0x30] sm:$0xff]
  %v78 = vld [vmem:[%s0 + $0x38] sm:$0xff]
  %79 = vmatprep.subr.mxu0 %v24
  %80 = vmatpush1.msra.mxu0 %v23
  %81 = vmatprep.subr.mxu0 %v27
  %82 = vmatpush1.msra.mxu0 %v26
  %83 = vmatprep.subr.mxu0 %v30
  %84 = vmatpush1.msra.mxu0 %v29
  %85 = vmatprep.subr.mxu0 %v33
  %86 = vmatpush1.msra.mxu0 %v32
  %87 = vmatprep.subr.mxu0 %v36
  %88 = vmatpush1.msra.mxu0 %v35
  %89 = vmatprep.subr.mxu0 %v39
  %90 = vmatpush1.msra.mxu0 %v38
  %91 = vmatprep.subr.mxu0 %v42
  %92 = vmatpush1.msra.mxu0 %v41
  %93 = vmatprep.subr.mxu0 %v45
  %94 = vmatpush1.msra.mxu0 %v44
  %95 = vmatprep.subr.mxu0 %v48
  %96 = vmatpush1.msra.mxu0 %v47
  %97 = vmatprep.subr.mxu0 %v51
  %98 = vmatpush1.msra.mxu0 %v50
  %99 = vmatprep.subr.mxu0 %v54
  %100 = vmatpush1.msra.mxu0 %v53
  %101 = vmatprep.subr.mxu0 %v57
  %102 = vmatpush1.msra.mxu0 %v56
  %103 = vmatprep.subr.mxu0 %v60
  %104 = vmatpush1.msra.mxu0 %v59
  %105 = vmatprep.subr.mxu0 %v63
  %106 = vmatpush1.msra.mxu0 %v62
  %107 = vmatprep.subr.mxu0 %v66
  %108 = vmatpush1.msra.mxu0 %v65
  %109 = vmatprep.subr.mxu0 %v69
  %110 = vmatpush1.msra.mxu0 %v68
  %111 = vmatprep.subr.mxu0 0.0
  %112 = vmatpush1.msra.mxu0 0.0
  %113 = vmatprep.subr.mxu0 0.0
  %114 = vmatpush1.msra.mxu0 0.0
  %115 = vmatprep.subr.mxu0 0.0
  %116 = vmatpush1.msra.mxu0 0.0
  %117 = vmatprep.subr.mxu0 0.0
  %118 = vmatpush1.msra.mxu0 0.0
  %119 = vmatprep.subr.mxu0 0.0
  %120 = vmatpush1.msra.mxu0 0.0
  %121 = vmatprep.subr.mxu0 0.0
  %122 = vmatpush1.msra.mxu0 0.0
  %123 = vmatprep.subr.mxu0 0.0
  %124 = vmatpush1.msra.mxu0 0.0
  %125 = vmatprep.subr.mxu0 0.0
  %126 = vmatpush1.msra.mxu0 0.0
  %127 = vmatprep.subr.mxu0 0.0
  %128 = vmatpush1.msra.mxu0 0.0
  %129 = vmatprep.subr.mxu0 0.0
  %130 = vmatpush1.msra.mxu0 0.0
  %131 = vmatprep.subr.mxu0 0.0
  %132 = vmatpush1.msra.mxu0 0.0
  %133 = vmatprep.subr.mxu0 0.0
  %134 = vmatpush1.msra.mxu0 0.0
  %135 = vmatprep.subr.mxu0 0.0
  %136 = vmatpush1.msra.mxu0 0.0
  %137 = vmatprep.subr.mxu0 0.0
  %138 = vmatpush1.msra.mxu0 0.0
  %139 = vmatprep.subr.mxu0 0.0
  %140 = vmatpush1.msra.mxu0 0.0
  %141 = vmatprep.subr.mxu0 0.0
  %142 = vmatpush1.msra.mxu0 0.0
  %143 = vmatprep.mubr.f32.mxu0 0.0
  %144 = vmatmul.mubr.f32.gmra.mrb[0].mxu0 %v71
  %v145 = vpop.f32.mrb[0].mxu0
  %v146 = vadd.f32 0.0, %v145
  %v147 = vpop.f32.mrb[0].mxu0
  %v148 = vadd.f32 0.0, %v147
  %149 = vmatprep.mubr.f32.mxu0 0.0
  %150 = vmatmul.mubr.f32.gmra.mrb[0].mxu0 %v72
  %v151 = vpop.f32.mrb[0].mxu0
  %v152 = vadd.f32 0.0, %v151
  %v153 = vpop.f32.mrb[0].mxu0
  %v154 = vadd.f32 0.0, %v153
  %155 = vmatprep.mubr.f32.mxu0 0.0
  %156 = vmatmul.mubr.f32.gmra.mrb[0].mxu0 %v73
  %v157 = vpop.f32.mrb[0].mxu0
  %v158 = vadd.f32 0.0, %v157
  %v159 = vpop.f32.mrb[0].mxu0
  %v160 = vadd.f32 0.0, %v159
  %161 = vmatprep.mubr.f32.mxu0 0.0
  %162 = vmatmul.mubr.f32.gmra.mrb[0].mxu0 %v74
  %v163 = vpop.f32.mrb[0].mxu0
  %v164 = vadd.f32 0.0, %v163
  %v165 = vpop.f32.mrb[0].mxu0
  %v166 = vadd.f32 0.0, %v165
  %167 = vmatprep.mubr.f32.mxu0 0.0
  %168 = vmatmul.mubr.f32.gmra.mrb[0].mxu0 %v75
  %v169 = vpop.f32.mrb[0].mxu0
  %v170 = vadd.f32 0.0, %v169
  %v171 = vpop.f32.mrb[0].mxu0
  %v172 = vadd.f32 0.0, %v171
  %173 = vmatprep.mubr.f32.mxu0 0.0
  %174 = vmatmul.mubr.f32.gmra.mrb[0].mxu0 %v76
  %v175 = vpop.f32.mrb[0].mxu0
  %v176 = vadd.f32 0.0, %v175
  %v177 = vpop.f32.mrb[0].mxu0
  %v178 = vadd.f32 0.0, %v177
  %179 = vmatprep.mubr.f32.mxu0 0.0
  %180 = vmatmul.mubr.f32.gmra.mrb[0].mxu0 %v77
  %v181 = vpop.f32.mrb[0].mxu0
  %v182 = vadd.f32 0.0, %v181
  %v183 = vpop.f32.mrb[0].mxu0
  %v184 = vadd.f32 0.0, %v183
  %185 = vmatprep.mubr.f32.mxu0 0.0
  %186 = vmatmul.mubr.f32.gmra.mrb[0].mxu0 %v78
  %v187 = vpop.f32.mrb[0].mxu0
  %v188 = vadd.f32 0.0, %v187
  %v189 = vpop.f32.mrb[0].mxu0
  %v190 = vadd.f32 0.0, %v189
  %191 = vdwg.mxu0
  %192 = vmatprep.subr.mxu0 0.0
  %193 = vmatpush1.msra.mxu0 %v25
  %194 = vmatprep.subr.mxu0 0.0
  %195 = vmatpush1.msra.mxu0 %v28
  %196 = vmatprep.subr.mxu0 0.0
  %197 = vmatpush1.msra.mxu0 %v31
  %198 = vmatprep.subr.mxu0 0.0
  %199 = vmatpush1.msra.mxu0 %v34
  %200 = vmatprep.subr.mxu0 0.0
  %201 = vmatpush1.msra.mxu0 %v37
  %202 = vmatprep.subr.mxu0 0.0
  %203 = vmatpush1.msra.mxu0 %v40
  %204 = vmatprep.subr.mxu0 0.0
  %205 = vmatpush1.msra.mxu0 %v43
  %206 = vmatprep.subr.mxu0 0.0
  %207 = vmatpush1.msra.mxu0 %v46
  %208 = vmatprep.subr.mxu0 0.0
  %209 = vmatpush1.msra.mxu0 %v49
  %210 = vmatprep.subr.mxu0 0.0
  %211 = vmatpush1.msra.mxu0 %v52
  %212 = vmatprep.subr.mxu0 0.0
  %213 = vmatpush1.msra.mxu0 %v55
  %214 = vmatprep.subr.mxu0 0.0
  %215 = vmatpush1.msra.mxu0 %v58
  %216 = vmatprep.subr.mxu0 0.0
  %217 = vmatpush1.msra.mxu0 %v61
  %218 = vmatprep.subr.mxu0 0.0
  %219 = vmatpush1.msra.mxu0 %v64
  %220 = vmatprep.subr.mxu0 0.0
  %221 = vmatpush1.msra.mxu0 %v67
  %222 = vmatprep.subr.mxu0 0.0
  %223 = vmatpush1.msra.mxu0 %v70
  %224 = vmatprep.subr.mxu0 0.0
  %225 = vmatpush1.msra.mxu0 0.0
  %226 = vmatprep.subr.mxu0 0.0
  %227 = vmatpush1.msra.mxu0 0.0
  %228 = vmatprep.subr.mxu0 0.0
  %229 = vmatpush1.msra.mxu0 0.0
  %230 = vmatprep.subr.mxu0 0.0
  %231 = vmatpush1.msra.mxu0 0.0
  %232 = vmatprep.subr.mxu0 0.0
  %233 = vmatpush1.msra.mxu0 0.0
  %234 = vmatprep.subr.mxu0 0.0
  %235 = vmatpush1.msra.mxu0 0.0
  %236 = vmatprep.subr.mxu0 0.0
  %237 = vmatpush1.msra.mxu0 0.0
  %238 = vmatprep.subr.mxu0 0.0
  %239 = vmatpush1.msra.mxu0 0.0
  %240 = vmatprep.subr.mxu0 0.0
  %241 = vmatpush1.msra.mxu0 0.0
  %242 = vmatprep.subr.mxu0 0.0
  %243 = vmatpush1.msra.mxu0 0.0
  %244 = vmatprep.subr.mxu0 0.0
  %245 = vmatpush1.msra.mxu0 0.0
  %246 = vmatprep.subr.mxu0 0.0
  %247 = vmatpush1.msra.mxu0 0.0
  %248 = vmatprep.subr.mxu0 0.0
  %249 = vmatpush1.msra.mxu0 0.0
  %250 = vmatprep.subr.mxu0 0.0
  %251 = vmatpush1.msra.mxu0 0.0
  %252 = vmatprep.subr.mxu0 0.0
  %253 = vmatpush1.msra.mxu0 0.0
  %254 = vmatprep.subr.mxu0 0.0
  %255 = vmatpush1.msra.mxu0 0.0
  %256 = vmatprep.mubr.f32.mxu0 0.0
  %257 = vmatmul.mubr.f32.gmra.mrb[0].mxu0 %v71
  %v258 = vpop.f32.mrb[0].mxu0
  %v259 = vadd.f32 0.0, %v258
  %v260 = vpop.f32.mrb[0].mxu0
  %261 = vmatprep.mubr.f32.mxu0 0.0
  %262 = vmatmul.mubr.f32.gmra.mrb[0].mxu0 %v72
  %v263 = vpop.f32.mrb[0].mxu0
  %v264 = vadd.f32 0.0, %v263
  %v265 = vpop.f32.mrb[0].mxu0
  %266 = vmatprep.mubr.f32.mxu0 0.0
  %267 = vmatmul.mubr.f32.gmra.mrb[0].mxu0 %v73
  %v268 = vpop.f32.mrb[0].mxu0
  %v269 = vadd.f32 0.0, %v268
  %v270 = vpop.f32.mrb[0].mxu0
  %271 = vmatprep.mubr.f32.mxu0 0.0
  %272 = vmatmul.mubr.f32.gmra.mrb[0].mxu0 %v74
  %v273 = vpop.f32.mrb[0].mxu0
  %v274 = vadd.f32 0.0, %v273
  %v275 = vpop.f32.mrb[0].mxu0
  %276 = vmatprep.mubr.f32.mxu0 0.0
  %277 = vmatmul.mubr.f32.gmra.mrb[0].mxu0 %v75
  %v278 = vpop.f32.mrb[0].mxu0
  %v279 = vadd.f32 0.0, %v278
  %v280 = vpop.f32.mrb[0].mxu0
  %281 = vmatprep.mubr.f32.mxu0 0.0
  %282 = vmatmul.mubr.f32.gmra.mrb[0].mxu0 %v76
  %v283 = vpop.f32.mrb[0].mxu0
  %v284 = vadd.f32 0.0, %v283
  %v285 = vpop.f32.mrb[0].mxu0
  %286 = vmatprep.mubr.f32.mxu0 0.0
  %287 = vmatmul.mubr.f32.gmra.mrb[0].mxu0 %v77
  %v288 = vpop.f32.mrb[0].mxu0
  %v289 = vadd.f32 0.0, %v288
  %v290 = vpop.f32.mrb[0].mxu0
  %291 = vmatprep.mubr.f32.mxu0 0.0
  %292 = vmatmul.mubr.f32.gmra.mrb[0].mxu0 %v78
  %v293 = vpop.f32.mrb[0].mxu0
  %v294 = vadd.f32 0.0, %v293
  %v295 = vpop.f32.mrb[0].mxu0
  %296 = vdwg.mxu0
  %297 = vst [vmem:[#allocation3] sm:$0xff] %v146
  %298 = vst [vmem:[#allocation3 + $0x8] sm:$0xff] %v148
  %299 = vst [vmem:[#allocation3 + $0x10] sm:$0xff] %v259
  %300 = vst [vmem:[#allocation3 + $0x18] sm:$0xff] %v152
  %301 = vst [vmem:[#allocation3 + $0x20] sm:$0xff] %v154
  %302 = vst [vmem:[#allocation3 + $0x28] sm:$0xff] %v264
  %303 = vst [vmem:[#allocation3 + $0x30] sm:$0xff] %v158
  %304 = vst [vmem:[#allocation3 + $0x38] sm:$0xff] %v160
  %305 = vst [vmem:[#allocation3 + $0x40] sm:$0xff] %v269
  %306 = vst [vmem:[#allocation3 + $0x48] sm:$0xff] %v164
  %307 = vst [vmem:[#allocation3 + $0x50] sm:$0xff] %v166
  %308 = vst [vmem:[#allocation3 + $0x58] sm:$0xff] %v274
  %309 = vst [vmem:[#allocation3 + $0x60] sm:$0xff] %v170
  %310 = vst [vmem:[#allocation3 + $0x68] sm:$0xff] %v172
  %311 = vst [vmem:[#allocation3 + $0x70] sm:$0xff] %v279
  %312 = vst [vmem:[#allocation3 + $0x78] sm:$0xff] %v176
  %313 = vst [vmem:[#allocation3 + $0x80] sm:$0xff] %v178
  %314 = vst [vmem:[#allocation3 + $0x88] sm:$0xff] %v284
  %315 = vst [vmem:[#allocation3 + $0x90] sm:$0xff] %v182
  %316 = vst [vmem:[#allocation3 + $0x98] sm:$0xff] %v184
  %317 = vst [vmem:[#allocation3 + $0xa0] sm:$0xff] %v289
  %318 = vst [vmem:[#allocation3 + $0xa8] sm:$0xff] %v188
  %319 = vst [vmem:[#allocation3 + $0xb0] sm:$0xff] %v190
  %320 = vst [vmem:[#allocation3 + $0xb8] sm:$0xff] %v294
  %v321 = vld [vmem:[%s2] sm:$0xff]
  %v322 = vld [vmem:[%s2 + $0x8] sm:$0xff]
  %v323 = vld [vmem:[%s2 + $0x10] sm:$0xff]
  %v324 = vld [vmem:[%s2 + $0x18] sm:$0xff]
  %v325 = vld [vmem:[%s2 + $0x20] sm:$0xff]
  %v326 = vld [vmem:[%s2 + $0x28] sm:$0xff]
  %v327 = vld [vmem:[%s2 + $0x30] sm:$0xff]
  %v328 = vld [vmem:[%s2 + $0x38] sm:$0xff]
  %v329 = vld [vmem:[%s2 + $0x40] sm:$0xff]
  %v330 = vld [vmem:[%s2 + $0x48] sm:$0xff]
  %v331 = vld [vmem:[%s2 + $0x50] sm:$0xff]
  %v332 = vld [vmem:[%s2 + $0x58] sm:$0xff]
  %v333 = vld [vmem:[%s2 + $0x60] sm:$0xff]
  %v334 = vld [vmem:[%s2 + $0x68] sm:$0xff]
  %v335 = vld [vmem:[%s2 + $0x70] sm:$0xff]
  %v336 = vld [vmem:[%s2 + $0x78] sm:$0xff]
  %v337 = vld [vmem:[%s2 + $0x80] sm:$0xff]
  %v338 = vld [vmem:[%s2 + $0x88] sm:$0xff]
  %v339 = vld [vmem:[%s2 + $0x90] sm:$0xff]
  %v340 = vld [vmem:[%s2 + $0x98] sm:$0xff]
  %v341 = vld [vmem:[%s2 + $0xa0] sm:$0xff]
  %v342 = vld [vmem:[%s2 + $0xa8] sm:$0xff]
  %v343 = vld [vmem:[%s2 + $0xb0] sm:$0xff]
  %v344 = vld [vmem:[%s2 + $0xb8] sm:$0xff]
  %v345 = vld [vmem:[%s2 + $0xc0] sm:$0xff]
  %v346 = vld [vmem:[%s2 + $0xc8] sm:$0xff]
  %v347 = vld [vmem:[%s2 + $0xd0] sm:$0xff]
  %v348 = vld [vmem:[%s2 + $0xd8] sm:$0xff]
  %v349 = vld [vmem:[%s2 + $0xe0] sm:$0xff]
  %v350 = vld [vmem:[%s2 + $0xe8] sm:$0xff]
  %v351 = vld [vmem:[%s2 + $0xf0] sm:$0xff]
  %v352 = vld [vmem:[%s2 + $0xf8] sm:$0xff]
  %v353 = vld [vmem:[#allocation2] sm:$0xff]
  %v354 = vld [vmem:[#allocation3] sm:$0xff]
  %v355 = vld [vmem:[#allocation3 + $0x8] sm:$0xff]
  %v356 = vld [vmem:[#allocation3 + $0x10] sm:$0xff]
  %357 = vmatprep.subr.mxu0 %v322
  %358 = vmatpush1.msra.mxu0 %v321
  %359 = vmatprep.subr.mxu0 %v324
  %360 = vmatpush1.msra.mxu0 %v323
  %361 = vmatprep.subr.mxu0 %v326
  %362 = vmatpush1.msra.mxu0 %v325
  %363 = vmatprep.subr.mxu0 %v328
  %364 = vmatpush1.msra.mxu0 %v327
  %365 = vmatprep.subr.mxu0 %v330
  %366 = vmatpush1.msra.mxu0 %v329
  %367 = vmatprep.subr.mxu0 %v332
  %368 = vmatpush1.msra.mxu0 %v331
  %369 = vmatprep.subr.mxu0 %v334
  %370 = vmatpush1.msra.mxu0 %v333
  %371 = vmatprep.subr.mxu0 %v336
  %372 = vmatpush1.msra.mxu0 %v335
  %373 = vmatprep.subr.mxu0 %v338
  %374 = vmatpush1.msra.mxu0 %v337
  %375 = vmatprep.subr.mxu0 %v340
  %376 = vmatpush1.msra.mxu0 %v339
  %377 = vmatprep.subr.mxu0 %v342
  %378 = vmatpush1.msra.mxu0 %v341
  %379 = vmatprep.subr.mxu0 %v344
  %380 = vmatpush1.msra.mxu0 %v343
  %381 = vmatprep.subr.mxu0 %v346
  %382 = vmatpush1.msra.mxu0 %v345
  %383 = vmatprep.subr.mxu0 %v348
  %384 = vmatpush1.msra.mxu0 %v347
  %385 = vmatprep.subr.mxu0 %v350
  %386 = vmatpush1.msra.mxu0 %v349
  %387 = vmatprep.subr.mxu0 %v352
  %388 = vmatpush1.msra.mxu0 %v351
  %389 = vmatprep.subr.mxu0 0.0
  %390 = vmatpush1.msra.mxu0 0.0
  %391 = vmatprep.subr.mxu0 0.0
  %392 = vmatpush1.msra.mxu0 0.0
  %393 = vmatprep.subr.mxu0 0.0
  %394 = vmatpush1.msra.mxu0 0.0
  %395 = vmatprep.subr.mxu0 0.0
  %396 = vmatpush1.msra.mxu0 0.0
  %397 = vmatprep.subr.mxu0 0.0
  %398 = vmatpush1.msra.mxu0 0.0
  %399 = vmatprep.subr.mxu0 0.0
  %400 = vmatpush1.msra.mxu0 0.0
  %401 = vmatprep.subr.mxu0 0.0
  %402 = vmatpush1.msra.mxu0 0.0
  %403 = vmatprep.subr.mxu0 0.0
  %404 = vmatpush1.msra.mxu0 0.0
  %405 = vmatprep.subr.mxu0 0.0
  %406 = vmatpush1.msra.mxu0 0.0
  %407 = vmatprep.subr.mxu0 0.0
  %408 = vmatpush1.msra.mxu0 0.0
  %409 = vmatprep.subr.mxu0 0.0
  %410 = vmatpush1.msra.mxu0 0.0
  %411 = vmatprep.subr.mxu0 0.0
  %412 = vmatpush1.msra.mxu0 0.0
  %413 = vmatprep.subr.mxu0 0.0
  %414 = vmatpush1.msra.mxu0 0.0
  %415 = vmatprep.subr.mxu0 0.0
  %416 = vmatpush1.msra.mxu0 0.0
  %417 = vmatprep.subr.mxu0 0.0
  %418 = vmatpush1.msra.mxu0 0.0
  %419 = vmatprep.subr.mxu0 0.0
  %420 = vmatpush1.msra.mxu0 0.0
  %421 = vmatprep.mubr.f32.mxu0 0.0
  %422 = vmatmul.mubr.f32.gmra.mrb[0].mxu0 %v353
  %v423 = vpop.f32.mrb[0].mxu0
  %v424 = vadd.f32 0.0, %v423
  %v425 = vpop.f32.mrb[0].mxu0
  %v426 = vadd.f32 0.0, %v425
  %427 = vdwg.mxu0
  %v428 = vadd.f32 %v354, %v424
  %v429 = vadd.f32 %v355, %v426
  %v430 = vxor.u32 %v428, 2147483648
  %v431 = vxor.u32 %v429, 2147483648
  %v432 = vmul.f32 %v430, 1.442695
  %v433 = vpow.pop %v432
  %v434 = vmul.f32 %v431, 1.442695
  %v435 = vpow.pop %v434
  %v436 = vadd.f32 %v433, 1.0
  %v437 = vadd.f32 %v435, 1.0
  %v438 = vrcp.pop %v436
  %v439 = vmul.f32 1.0, %v438
  %v440 = vrcp.pop %v437
  %v441 = vmul.f32 1.0, %v440
  %v442 = vmul.f32 %v439, %v353
  %v443 = vadd.f32 %v356, %v442
  %v444 = vtanh.pop %v443
  %v445 = vsub.f32 %v353, %v444
  %v446 = vmul.f32 %v441, %v445
  %v447 = vadd.f32 %v444, %v446
  %448 = vst [vmem:[%s4] sm:$0xff] %v447
  %s449 = scalar_lea.vmem [#allocation3], 24
  %v450 = vld [vmem:[%s449] sm:$0xff]
  %v451 = vld [vmem:[%s449 + $0x8] sm:$0xff]
  %v452 = vld [vmem:[%s449 + $0x10] sm:$0xff]
  %453 = vmatprep.subr.mxu0 %v322
  %454 = vmatpush1.msra.mxu0 %v321
  %455 = vmatprep.subr.mxu0 %v324
  %456 = vmatpush1.msra.mxu0 %v323
  %457 = vmatprep.subr.mxu0 %v326
  %458 = vmatpush1.msra.mxu0 %v325
  %459 = vmatprep.subr.mxu0 %v328
  %460 = vmatpush1.msra.mxu0 %v327
  %461 = vmatprep.subr.mxu0 %v330
  %462 = vmatpush1.msra.mxu0 %v329
  %463 = vmatprep.subr.mxu0 %v332
  %464 = vmatpush1.msra.mxu0 %v331
  %465 = vmatprep.subr.mxu0 %v334
  %466 = vmatpush1.msra.mxu0 %v333
  %467 = vmatprep.subr.mxu0 %v336
  %468 = vmatpush1.msra.mxu0 %v335
  %469 = vmatprep.subr.mxu0 %v338
  %470 = vmatpush1.msra.mxu0 %v337
  %471 = vmatprep.subr.mxu0 %v340
  %472 = vmatpush1.msra.mxu0 %v339
  %473 = vmatprep.subr.mxu0 %v342
  %474 = vmatpush1.msra.mxu0 %v341
  %475 = vmatprep.subr.mxu0 %v344
  %476 = vmatpush1.msra.mxu0 %v343
  %477 = vmatprep.subr.mxu0 %v346
  %478 = vmatpush1.msra.mxu0 %v345
  %479 = vmatprep.subr.mxu0 %v348
  %480 = vmatpush1.msra.mxu0 %v347
  %481 = vmatprep.subr.mxu0 %v350
  %482 = vmatpush1.msra.mxu0 %v349
  %483 = vmatprep.subr.mxu0 %v352
  %484 = vmatpush1.msra.mxu0 %v351
  %485 = vmatprep.subr.mxu0 0.0
  %486 = vmatpush1.msra.mxu0 0.0
  %487 = vmatprep.subr.mxu0 0.0
  %488 = vmatpush1.msra.mxu0 0.0
  %489 = vmatprep.subr.mxu0 0.0
  %490 = vmatpush1.msra.mxu0 0.0
  %491 = vmatprep.subr.mxu0 0.0
  %492 = vmatpush1.msra.mxu0 0.0
  %493 = vmatprep.subr.mxu0 0.0
  %494 = vmatpush1.msra.mxu0 0.0
  %495 = vmatprep.subr.mxu0 0.0
  %496 = vmatpush1.msra.mxu0 0.0
  %497 = vmatprep.subr.mxu0 0.0
  %498 = vmatpush1.msra.mxu0 0.0
  %499 = vmatprep.subr.mxu0 0.0
  %500 = vmatpush1.msra.mxu0 0.0
  %501 = vmatprep.subr.mxu0 0.0
  %502 = vmatpush1.msra.mxu0 0.0
  %503 = vmatprep.subr.mxu0 0.0
  %504 = vmatpush1.msra.mxu0 0.0
  %505 = vmatprep.subr.mxu0 0.0
  %506 = vmatpush1.msra.mxu0 0.0
  %507 = vmatprep.subr.mxu0 0.0
  %508 = vmatpush1.msra.mxu0 0.0
  %509 = vmatprep.subr.mxu0 0.0
  %510 = vmatpush1.msra.mxu0 0.0
  %511 = vmatprep.subr.mxu0 0.0
  %512 = vmatpush1.msra.mxu0 0.0
  %513 = vmatprep.subr.mxu0 0.0
  %514 = vmatpush1.msra.mxu0 0.0
  %515 = vmatprep.subr.mxu0 0.0
  %516 = vmatpush1.msra.mxu0 0.0
  %517 = vmatprep.mubr.f32.mxu0 0.0
  %518 = vmatmul.mubr.f32.gmra.mrb[0].mxu0 %v447
  %v519 = vpop.f32.mrb[0].mxu0
  %v520 = vadd.f32 0.0, %v519
  %v521 = vpop.f32.mrb[0].mxu0
  %v522 = vadd.f32 0.0, %v521
  %523 = vdwg.mxu0
  %v524 = vadd.f32 %v450, %v520
  %v525 = vadd.f32 %v451, %v522
  %v526 = vxor.u32 %v524, 2147483648
  %v527 = vxor.u32 %v525, 2147483648
  %v528 = vmul.f32 %v526, 1.442695
  %v529 = vpow.pop %v528
  %v530 = vmul.f32 %v527, 1.442695
  %v531 = vpow.pop %v530
  %v532 = vadd.f32 %v529, 1.0
  %v533 = vadd.f32 %v531, 1.0
  %v534 = vrcp.pop %v532
  %v535 = vmul.f32 1.0, %v534
  %v536 = vrcp.pop %v533
  %v537 = vmul.f32 1.0, %v536
  %v538 = vmul.f32 %v535, %v447
  %v539 = vadd.f32 %v452, %v538
  %v540 = vtanh.pop %v539
  %v541 = vsub.f32 %v447, %v540
  %v542 = vmul.f32 %v537, %v541
  %v543 = vadd.f32 %v540, %v542
  %s544 = scalar_lea.vmem %s4, 8
  %545 = vst [vmem:[%s544] sm:$0xff] %v543
  %s546 = scalar_lea.vmem [#allocation3], 48
  %v547 = vld [vmem:[%s546] sm:$0xff]
  %v548 = vld [vmem:[%s546 + $0x8] sm:$0xff]
  %v549 = vld [vmem:[%s546 + $0x10] sm:$0xff]
  %550 = vmatprep.subr.mxu0 %v322
  %551 = vmatpush1.msra.mxu0 %v321
  %552 = vmatprep.subr.mxu0 %v324
  %553 = vmatpush1.msra.mxu0 %v323
  %554 = vmatprep.subr.mxu0 %v326
  %555 = vmatpush1.msra.mxu0 %v325
  %556 = vmatprep.subr.mxu0 %v328
  %557 = vmatpush1.msra.mxu0 %v327
  %558 = vmatprep.subr.mxu0 %v330
  %559 = vmatpush1.msra.mxu0 %v329
  %560 = vmatprep.subr.mxu0 %v332
  %561 = vmatpush1.msra.mxu0 %v331
  %562 = vmatprep.subr.mxu0 %v334
  %563 = vmatpush1.msra.mxu0 %v333
  %564 = vmatprep.subr.mxu0 %v336
  %565 = vmatpush1.msra.mxu0 %v335
  %566 = vmatprep.subr.mxu0 %v338
  %567 = vmatpush1.msra.mxu0 %v337
  %568 = vmatprep.subr.mxu0 %v340
  %569 = vmatpush1.msra.mxu0 %v339
  %570 = vmatprep.subr.mxu0 %v342
  %571 = vmatpush1.msra.mxu0 %v341
  %572 = vmatprep.subr.mxu0 %v344
  %573 = vmatpush1.msra.mxu0 %v343
  %574 = vmatprep.subr.mxu0 %v346
  %575 = vmatpush1.msra.mxu0 %v345
  %576 = vmatprep.subr.mxu0 %v348
  %577 = vmatpush1.msra.mxu0 %v347
  %578 = vmatprep.subr.mxu0 %v350
  %579 = vmatpush1.msra.mxu0 %v349
  %580 = vmatprep.subr.mxu0 %v352
  %581 = vmatpush1.msra.mxu0 %v351
  %582 = vmatprep.subr.mxu0 0.0
  %583 = vmatpush1.msra.mxu0 0.0
  %584 = vmatprep.subr.mxu0 0.0
  %585 = vmatpush1.msra.mxu0 0.0
  %586 = vmatprep.subr.mxu0 0.0
  %587 = vmatpush1.msra.mxu0 0.0
  %588 = vmatprep.subr.mxu0 0.0
  %589 = vmatpush1.msra.mxu0 0.0
  %590 = vmatprep.subr.mxu0 0.0
  %591 = vmatpush1.msra.mxu0 0.0
  %592 = vmatprep.subr.mxu0 0.0
  %593 = vmatpush1.msra.mxu0 0.0
  %594 = vmatprep.subr.mxu0 0.0
  %595 = vmatpush1.msra.mxu0 0.0
  %596 = vmatprep.subr.mxu0 0.0
  %597 = vmatpush1.msra.mxu0 0.0
  %598 = vmatprep.subr.mxu0 0.0
  %599 = vmatpush1.msra.mxu0 0.0
  %600 = vmatprep.subr.mxu0 0.0
  %601 = vmatpush1.msra.mxu0 0.0
  %602 = vmatprep.subr.mxu0 0.0
  %603 = vmatpush1.msra.mxu0 0.0
  %604 = vmatprep.subr.mxu0 0.0
  %605 = vmatpush1.msra.mxu0 0.0
  %606 = vmatprep.subr.mxu0 0.0
  %607 = vmatpush1.msra.mxu0 0.0
  %608 = vmatprep.subr.mxu0 0.0
  %609 = vmatpush1.msra.mxu0 0.0
  %610 = vmatprep.subr.mxu0 0.0
  %611 = vmatpush1.msra.mxu0 0.0
  %612 = vmatprep.subr.mxu0 0.0
  %613 = vmatpush1.msra.mxu0 0.0
  %614 = vmatprep.mubr.f32.mxu0 0.0
  %615 = vmatmul.mubr.f32.gmra.mrb[0].mxu0 %v543
  %v616 = vpop.f32.mrb[0].mxu0
  %v617 = vadd.f32 0.0, %v616
  %v618 = vpop.f32.mrb[0].mxu0
  %v619 = vadd.f32 0.0, %v618
  %620 = vdwg.mxu0
  %v621 = vadd.f32 %v547, %v617
  %v622 = vadd.f32 %v548, %v619
  %v623 = vxor.u32 %v621, 2147483648
  %v624 = vxor.u32 %v622, 2147483648
  %v625 = vmul.f32 %v623, 1.442695
  %v626 = vpow.pop %v625
  %v627 = vmul.f32 %v624, 1.442695
  %v628 = vpow.pop %v627
  %v629 = vadd.f32 %v626, 1.0
  %v630 = vadd.f32 %v628, 1.0
  %v631 = vrcp.pop %v629
  %v632 = vmul.f32 1.0, %v631
  %v633 = vrcp.pop %v630
  %v634 = vmul.f32 1.0, %v633
  %v635 = vmul.f32 %v632, %v543
  %v636 = vadd.f32 %v549, %v635
  %v637 = vtanh.pop %v636
  %v638 = vsub.f32 %v543, %v637
  %v639 = vmul.f32 %v634, %v638
  %v640 = vadd.f32 %v637, %v639
  %s641 = scalar_lea.vmem %s4, 16
  %642 = vst [vmem:[%s641] sm:$0xff] %v640
  %s643 = scalar_lea.vmem [#allocation3], 72
  %v644 = vld [vmem:[%s643] sm:$0xff]
  %v645 = vld [vmem:[%s643 + $0x8] sm:$0xff]
  %v646 = vld [vmem:[%s643 + $0x10] sm:$0xff]
  %647 = vmatprep.subr.mxu0 %v322
  %648 = vmatpush1.msra.mxu0 %v321
  %649 = vmatprep.subr.mxu0 %v324
  %650 = vmatpush1.msra.mxu0 %v323
  %651 = vmatprep.subr.mxu0 %v326
  %652 = vmatpush1.msra.mxu0 %v325
  %653 = vmatprep.subr.mxu0 %v328
  %654 = vmatpush1.msra.mxu0 %v327
  %655 = vmatprep.subr.mxu0 %v330
  %656 = vmatpush1.msra.mxu0 %v329
  %657 = vmatprep.subr.mxu0 %v332
  %658 = vmatpush1.msra.mxu0 %v331
  %659 = vmatprep.subr.mxu0 %v334
  %660 = vmatpush1.msra.mxu0 %v333
  %661 = vmatprep.subr.mxu0 %v336
  %662 = vmatpush1.msra.mxu0 %v335
  %663 = vmatprep.subr.mxu0 %v338
  %664 = vmatpush1.msra.mxu0 %v337
  %665 = vmatprep.subr.mxu0 %v340
  %666 = vmatpush1.msra.mxu0 %v339
  %667 = vmatprep.subr.mxu0 %v342
  %668 = vmatpush1.msra.mxu0 %v341
  %669 = vmatprep.subr.mxu0 %v344
  %670 = vmatpush1.msra.mxu0 %v343
  %671 = vmatprep.subr.mxu0 %v346
  %672 = vmatpush1.msra.mxu0 %v345
  %673 = vmatprep.subr.mxu0 %v348
  %674 = vmatpush1.msra.mxu0 %v347
  %675 = vmatprep.subr.mxu0 %v350
  %676 = vmatpush1.msra.mxu0 %v349
  %677 = vmatprep.subr.mxu0 %v352
  %678 = vmatpush1.msra.mxu0 %v351
  %679 = vmatprep.subr.mxu0 0.0
  %680 = vmatpush1.msra.mxu0 0.0
  %681 = vmatprep.subr.mxu0 0.0
  %682 = vmatpush1.msra.mxu0 0.0
  %683 = vmatprep.subr.mxu0 0.0
  %684 = vmatpush1.msra.mxu0 0.0
  %685 = vmatprep.subr.mxu0 0.0
  %686 = vmatpush1.msra.mxu0 0.0
  %687 = vmatprep.subr.mxu0 0.0
  %688 = vmatpush1.msra.mxu0 0.0
  %689 = vmatprep.subr.mxu0 0.0
  %690 = vmatpush1.msra.mxu0 0.0
  %691 = vmatprep.subr.mxu0 0.0
  %692 = vmatpush1.msra.mxu0 0.0
  %693 = vmatprep.subr.mxu0 0.0
  %694 = vmatpush1.msra.mxu0 0.0
  %695 = vmatprep.subr.mxu0 0.0
  %696 = vmatpush1.msra.mxu0 0.0
  %697 = vmatprep.subr.mxu0 0.0
  %698 = vmatpush1.msra.mxu0 0.0
  %699 = vmatprep.subr.mxu0 0.0
  %700 = vmatpush1.msra.mxu0 0.0
  %701 = vmatprep.subr.mxu0 0.0
  %702 = vmatpush1.msra.mxu0 0.0
  %703 = vmatprep.subr.mxu0 0.0
  %704 = vmatpush1.msra.mxu0 0.0
  %705 = vmatprep.subr.mxu0 0.0
  %706 = vmatpush1.msra.mxu0 0.0
  %707 = vmatprep.subr.mxu0 0.0
  %708 = vmatpush1.msra.mxu0 0.0
  %709 = vmatprep.subr.mxu0 0.0
  %710 = vmatpush1.msra.mxu0 0.0
  %711 = vmatprep.mubr.f32.mxu0 0.0
  %712 = vmatmul.mubr.f32.gmra.mrb[0].mxu0 %v640
  %v713 = vpop.f32.mrb[0].mxu0
  %v714 = vadd.f32 0.0, %v713
  %v715 = vpop.f32.mrb[0].mxu0
  %v716 = vadd.f32 0.0, %v715
  %717 = vdwg.mxu0
  %v718 = vadd.f32 %v644, %v714
  %v719 = vadd.f32 %v645, %v716
  %v720 = vxor.u32 %v718, 2147483648
  %v721 = vxor.u32 %v719, 2147483648
  %v722 = vmul.f32 %v720, 1.442695
  %v723 = vpow.pop %v722
  %v724 = vmul.f32 %v721, 1.442695
  %v725 = vpow.pop %v724
  %v726 = vadd.f32 %v723, 1.0
  %v727 = vadd.f32 %v725, 1.0
  %v728 = vrcp.pop %v726
  %v729 = vmul.f32 1.0, %v728
  %v730 = vrcp.pop %v727
  %v731 = vmul.f32 1.0, %v730
  %v732 = vmul.f32 %v729, %v640
  %v733 = vadd.f32 %v646, %v732
  %v734 = vtanh.pop %v733
  %v735 = vsub.f32 %v640, %v734
  %v736 = vmul.f32 %v731, %v735
  %v737 = vadd.f32 %v734, %v736
  %s738 = scalar_lea.vmem %s4, 24
  %739 = vst [vmem:[%s738] sm:$0xff] %v737
  %s740 = scalar_lea.vmem [#allocation3], 96
  %v741 = vld [vmem:[%s740] sm:$0xff]
  %v742 = vld [vmem:[%s740 + $0x8] sm:$0xff]
  %v743 = vld [vmem:[%s740 + $0x10] sm:$0xff]
  %744 = vmatprep.subr.mxu0 %v322
  %745 = vmatpush1.msra.mxu0 %v321
  %746 = vmatprep.subr.mxu0 %v324
  %747 = vmatpush1.msra.mxu0 %v323
  %748 = vmatprep.subr.mxu0 %v326
  %749 = vmatpush1.msra.mxu0 %v325
  %750 = vmatprep.subr.mxu0 %v328
  %751 = vmatpush1.msra.mxu0 %v327
  %752 = vmatprep.subr.mxu0 %v330
  %753 = vmatpush1.msra.mxu0 %v329
  %754 = vmatprep.subr.mxu0 %v332
  %755 = vmatpush1.msra.mxu0 %v331
  %756 = vmatprep.subr.mxu0 %v334
  %757 = vmatpush1.msra.mxu0 %v333
  %758 = vmatprep.subr.mxu0 %v336
  %759 = vmatpush1.msra.mxu0 %v335
  %760 = vmatprep.subr.mxu0 %v338
  %761 = vmatpush1.msra.mxu0 %v337
  %762 = vmatprep.subr.mxu0 %v340
  %763 = vmatpush1.msra.mxu0 %v339
  %764 = vmatprep.subr.mxu0 %v342
  %765 = vmatpush1.msra.mxu0 %v341
  %766 = vmatprep.subr.mxu0 %v344
  %767 = vmatpush1.msra.mxu0 %v343
  %768 = vmatprep.subr.mxu0 %v346
  %769 = vmatpush1.msra.mxu0 %v345
  %770 = vmatprep.subr.mxu0 %v348
  %771 = vmatpush1.msra.mxu0 %v347
  %772 = vmatprep.subr.mxu0 %v350
  %773 = vmatpush1.msra.mxu0 %v349
  %774 = vmatprep.subr.mxu0 %v352
  %775 = vmatpush1.msra.mxu0 %v351
  %776 = vmatprep.subr.mxu0 0.0
  %777 = vmatpush1.msra.mxu0 0.0
  %778 = vmatprep.subr.mxu0 0.0
  %779 = vmatpush1.msra.mxu0 0.0
  %780 = vmatprep.subr.mxu0 0.0
  %781 = vmatpush1.msra.mxu0 0.0
  %782 = vmatprep.subr.mxu0 0.0
  %783 = vmatpush1.msra.mxu0 0.0
  %784 = vmatprep.subr.mxu0 0.0
  %785 = vmatpush1.msra.mxu0 0.0
  %786 = vmatprep.subr.mxu0 0.0
  %787 = vmatpush1.msra.mxu0 0.0
  %788 = vmatprep.subr.mxu0 0.0
  %789 = vmatpush1.msra.mxu0 0.0
  %790 = vmatprep.subr.mxu0 0.0
  %791 = vmatpush1.msra.mxu0 0.0
  %792 = vmatprep.subr.mxu0 0.0
  %793 = vmatpush1.msra.mxu0 0.0
  %794 = vmatprep.subr.mxu0 0.0
  %795 = vmatpush1.msra.mxu0 0.0
  %796 = vmatprep.subr.mxu0 0.0
  %797 = vmatpush1.msra.mxu0 0.0
  %798 = vmatprep.subr.mxu0 0.0
  %799 = vmatpush1.msra.mxu0 0.0
  %800 = vmatprep.subr.mxu0 0.0
  %801 = vmatpush1.msra.mxu0 0.0
  %802 = vmatprep.subr.mxu0 0.0
  %803 = vmatpush1.msra.mxu0 0.0
  %804 = vmatprep.subr.mxu0 0.0
  %805 = vmatpush1.msra.mxu0 0.0
  %806 = vmatprep.subr.mxu0 0.0
  %807 = vmatpush1.msra.mxu0 0.0
  %808 = vmatprep.mubr.f32.mxu0 0.0
  %809 = vmatmul.mubr.f32.gmra.mrb[0].mxu0 %v737
  %v810 = vpop.f32.mrb[0].mxu0
  %v811 = vadd.f32 0.0, %v810
  %v812 = vpop.f32.mrb[0].mxu0
  %v813 = vadd.f32 0.0, %v812
  %814 = vdwg.mxu0
  %v815 = vadd.f32 %v741, %v811
  %v816 = vadd.f32 %v742, %v813
  %v817 = vxor.u32 %v815, 2147483648
  %v818 = vxor.u32 %v816, 2147483648
  %v819 = vmul.f32 %v817, 1.442695
  %v820 = vpow.pop %v819
  %v821 = vmul.f32 %v818, 1.442695
  %v822 = vpow.pop %v821
  %v823 = vadd.f32 %v820, 1.0
  %v824 = vadd.f32 %v822, 1.0
  %v825 = vrcp.pop %v823
  %v826 = vmul.f32 1.0, %v825
  %v827 = vrcp.pop %v824
  %v828 = vmul.f32 1.0, %v827
  %v829 = vmul.f32 %v826, %v737
  %v830 = vadd.f32 %v743, %v829
  %v831 = vtanh.pop %v830
  %v832 = vsub.f32 %v737, %v831
  %v833 = vmul.f32 %v828, %v832
  %v834 = vadd.f32 %v831, %v833
  %s835 = scalar_lea.vmem %s4, 32
  %836 = vst [vmem:[%s835] sm:$0xff] %v834
  %s837 = scalar_lea.vmem [#allocation3], 120
  %v838 = vld [vmem:[%s837] sm:$0xff]
  %v839 = vld [vmem:[%s837 + $0x8] sm:$0xff]
  %v840 = vld [vmem:[%s837 + $0x10] sm:$0xff]
  %841 = vmatprep.subr.mxu0 %v322
  %842 = vmatpush1.msra.mxu0 %v321
  %843 = vmatprep.subr.mxu0 %v324
  %844 = vmatpush1.msra.mxu0 %v323
  %845 = vmatprep.subr.mxu0 %v326
  %846 = vmatpush1.msra.mxu0 %v325
  %847 = vmatprep.subr.mxu0 %v328
  %848 = vmatpush1.msra.mxu0 %v327
  %849 = vmatprep.subr.mxu0 %v330
  %850 = vmatpush1.msra.mxu0 %v329
  %851 = vmatprep.subr.mxu0 %v332
  %852 = vmatpush1.msra.mxu0 %v331
  %853 = vmatprep.subr.mxu0 %v334
  %854 = vmatpush1.msra.mxu0 %v333
  %855 = vmatprep.subr.mxu0 %v336
  %856 = vmatpush1.msra.mxu0 %v335
  %857 = vmatprep.subr.mxu0 %v338
  %858 = vmatpush1.msra.mxu0 %v337
  %859 = vmatprep.subr.mxu0 %v340
  %860 = vmatpush1.msra.mxu0 %v339
  %861 = vmatprep.subr.mxu0 %v342
  %862 = vmatpush1.msra.mxu0 %v341
  %863 = vmatprep.subr.mxu0 %v344
  %864 = vmatpush1.msra.mxu0 %v343
  %865 = vmatprep.subr.mxu0 %v346
  %866 = vmatpush1.msra.mxu0 %v345
  %867 = vmatprep.subr.mxu0 %v348
  %868 = vmatpush1.msra.mxu0 %v347
  %869 = vmatprep.subr.mxu0 %v350
  %870 = vmatpush1.msra.mxu0 %v349
  %871 = vmatprep.subr.mxu0 %v352
  %872 = vmatpush1.msra.mxu0 %v351
  %873 = vmatprep.subr.mxu0 0.0
  %874 = vmatpush1.msra.mxu0 0.0
  %875 = vmatprep.subr.mxu0 0.0
  %876 = vmatpush1.msra.mxu0 0.0
  %877 = vmatprep.subr.mxu0 0.0
  %878 = vmatpush1.msra.mxu0 0.0
  %879 = vmatprep.subr.mxu0 0.0
  %880 = vmatpush1.msra.mxu0 0.0
  %881 = vmatprep.subr.mxu0 0.0
  %882 = vmatpush1.msra.mxu0 0.0
  %883 = vmatprep.subr.mxu0 0.0
  %884 = vmatpush1.msra.mxu0 0.0
  %885 = vmatprep.subr.mxu0 0.0
  %886 = vmatpush1.msra.mxu0 0.0
  %887 = vmatprep.subr.mxu0 0.0
  %888 = vmatpush1.msra.mxu0 0.0
  %889 = vmatprep.subr.mxu0 0.0
  %890 = vmatpush1.msra.mxu0 0.0
  %891 = vmatprep.subr.mxu0 0.0
  %892 = vmatpush1.msra.mxu0 0.0
  %893 = vmatprep.subr.mxu0 0.0
  %894 = vmatpush1.msra.mxu0 0.0
  %895 = vmatprep.subr.mxu0 0.0
  %896 = vmatpush1.msra.mxu0 0.0
  %897 = vmatprep.subr.mxu0 0.0
  %898 = vmatpush1.msra.mxu0 0.0
  %899 = vmatprep.subr.mxu0 0.0
  %900 = vmatpush1.msra.mxu0 0.0
  %901 = vmatprep.subr.mxu0 0.0
  %902 = vmatpush1.msra.mxu0 0.0
  %903 = vmatprep.subr.mxu0 0.0
  %904 = vmatpush1.msra.mxu0 0.0
  %905 = vmatprep.mubr.f32.mxu0 0.0
  %906 = vmatmul.mubr.f32.gmra.mrb[0].mxu0 %v834
  %v907 = vpop.f32.mrb[0].mxu0
  %v908 = vadd.f32 0.0, %v907
  %v909 = vpop.f32.mrb[0].mxu0
  %v910 = vadd.f32 0.0, %v909
  %911 = vdwg.mxu0
  %v912 = vadd.f32 %v838, %v908
  %v913 = vadd.f32 %v839, %v910
  %v914 = vxor.u32 %v912, 2147483648
  %v915 = vxor.u32 %v913, 2147483648
  %v916 = vmul.f32 %v914, 1.442695
  %v917 = vpow.pop %v916
  %v918 = vmul.f32 %v915, 1.442695
  %v919 = vpow.pop %v918
  %v920 = vadd.f32 %v917, 1.0
  %v921 = vadd.f32 %v919, 1.0
  %v922 = vrcp.pop %v920
  %v923 = vmul.f32 1.0, %v922
  %v924 = vrcp.pop %v921
  %v925 = vmul.f32 1.0, %v924
  %v926 = vmul.f32 %v923, %v834
  %v927 = vadd.f32 %v840, %v926
  %v928 = vtanh.pop %v927
  %v929 = vsub.f32 %v834, %v928
  %v930 = vmul.f32 %v925, %v929
  %v931 = vadd.f32 %v928, %v930
  %s932 = scalar_lea.vmem %s4, 40
  %933 = vst [vmem:[%s932] sm:$0xff] %v931
  %s934 = scalar_lea.vmem [#allocation3], 144
  %v935 = vld [vmem:[%s934] sm:$0xff]
  %v936 = vld [vmem:[%s934 + $0x8] sm:$0xff]
  %v937 = vld [vmem:[%s934 + $0x10] sm:$0xff]
  %938 = vmatprep.subr.mxu0 %v322
  %939 = vmatpush1.msra.mxu0 %v321
  %940 = vmatprep.subr.mxu0 %v324
  %941 = vmatpush1.msra.mxu0 %v323
  %942 = vmatprep.subr.mxu0 %v326
  %943 = vmatpush1.msra.mxu0 %v325
  %944 = vmatprep.subr.mxu0 %v328
  %945 = vmatpush1.msra.mxu0 %v327
  %946 = vmatprep.subr.mxu0 %v330
  %947 = vmatpush1.msra.mxu0 %v329
  %948 = vmatprep.subr.mxu0 %v332
  %949 = vmatpush1.msra.mxu0 %v331
  %950 = vmatprep.subr.mxu0 %v334
  %951 = vmatpush1.msra.mxu0 %v333
  %952 = vmatprep.subr.mxu0 %v336
  %953 = vmatpush1.msra.mxu0 %v335
  %954 = vmatprep.subr.mxu0 %v338
  %955 = vmatpush1.msra.mxu0 %v337
  %956 = vmatprep.subr.mxu0 %v340
  %957 = vmatpush1.msra.mxu0 %v339
  %958 = vmatprep.subr.mxu0 %v342
  %959 = vmatpush1.msra.mxu0 %v341
  %960 = vmatprep.subr.mxu0 %v344
  %961 = vmatpush1.msra.mxu0 %v343
  %962 = vmatprep.subr.mxu0 %v346
  %963 = vmatpush1.msra.mxu0 %v345
  %964 = vmatprep.subr.mxu0 %v348
  %965 = vmatpush1.msra.mxu0 %v347
  %966 = vmatprep.subr.mxu0 %v350
  %967 = vmatpush1.msra.mxu0 %v349
  %968 = vmatprep.subr.mxu0 %v352
  %969 = vmatpush1.msra.mxu0 %v351
  %970 = vmatprep.subr.mxu0 0.0
  %971 = vmatpush1.msra.mxu0 0.0
  %972 = vmatprep.subr.mxu0 0.0
  %973 = vmatpush1.msra.mxu0 0.0
  %974 = vmatprep.subr.mxu0 0.0
  %975 = vmatpush1.msra.mxu0 0.0
  %976 = vmatprep.subr.mxu0 0.0
  %977 = vmatpush1.msra.mxu0 0.0
  %978 = vmatprep.subr.mxu0 0.0
  %979 = vmatpush1.msra.mxu0 0.0
  %980 = vmatprep.subr.mxu0 0.0
  %981 = vmatpush1.msra.mxu0 0.0
  %982 = vmatprep.subr.mxu0 0.0
  %983 = vmatpush1.msra.mxu0 0.0
  %984 = vmatprep.subr.mxu0 0.0
  %985 = vmatpush1.msra.mxu0 0.0
  %986 = vmatprep.subr.mxu0 0.0
  %987 = vmatpush1.msra.mxu0 0.0
  %988 = vmatprep.subr.mxu0 0.0
  %989 = vmatpush1.msra.mxu0 0.0
  %990 = vmatprep.subr.mxu0 0.0
  %991 = vmatpush1.msra.mxu0 0.0
  %992 = vmatprep.subr.mxu0 0.0
  %993 = vmatpush1.msra.mxu0 0.0
  %994 = vmatprep.subr.mxu0 0.0
  %995 = vmatpush1.msra.mxu0 0.0
  %996 = vmatprep.subr.mxu0 0.0
  %997 = vmatpush1.msra.mxu0 0.0
  %998 = vmatprep.subr.mxu0 0.0
  %999 = vmatpush1.msra.mxu0 0.0
  %1000 = vmatprep.subr.mxu0 0.0
  %1001 = vmatpush1.msra.mxu0 0.0
  %1002 = vmatprep.mubr.f32.mxu0 0.0
  %1003 = vmatmul.mubr.f32.gmra.mrb[0].mxu0 %v931
  %v1004 = vpop.f32.mrb[0].mxu0
  %v1005 = vadd.f32 0.0, %v1004
  %v1006 = vpop.f32.mrb[0].mxu0
  %v1007 = vadd.f32 0.0, %v1006
  %1008 = vdwg.mxu0
  %v1009 = vadd.f32 %v935, %v1005
  %v1010 = vadd.f32 %v936, %v1007
  %v1011 = vxor.u32 %v1009, 2147483648
  %v1012 = vxor.u32 %v1010, 2147483648
  %v1013 = vmul.f32 %v1011, 1.442695
  %v1014 = vpow.pop %v1013
  %v1015 = vmul.f32 %v1012, 1.442695
  %v1016 = vpow.pop %v1015
  %v1017 = vadd.f32 %v1014, 1.0
  %v1018 = vadd.f32 %v1016, 1.0
  %v1019 = vrcp.pop %v1017
  %v1020 = vmul.f32 1.0, %v1019
  %v1021 = vrcp.pop %v1018
  %v1022 = vmul.f32 1.0, %v1021
  %v1023 = vmul.f32 %v1020, %v931
  %v1024 = vadd.f32 %v937, %v1023
  %v1025 = vtanh.pop %v1024
  %v1026 = vsub.f32 %v931, %v1025
  %v1027 = vmul.f32 %v1022, %v1026
  %v1028 = vadd.f32 %v1025, %v1027
  %s1029 = scalar_lea.vmem %s4, 48
  %1030 = vst [vmem:[%s1029] sm:$0xff] %v1028
  %s1031 = scalar_lea.vmem [#allocation3], 168
  %v1032 = vld [vmem:[%s1031] sm:$0xff]
  %v1033 = vld [vmem:[%s1031 + $0x8] sm:$0xff]
  %v1034 = vld [vmem:[%s1031 + $0x10] sm:$0xff]
  %1035 = vmatprep.subr.mxu0 %v322
  %1036 = vmatpush1.msra.mxu0 %v321
  %1037 = vmatprep.subr.mxu0 %v324
  %1038 = vmatpush1.msra.mxu0 %v323
  %1039 = vmatprep.subr.mxu0 %v326
  %1040 = vmatpush1.msra.mxu0 %v325
  %1041 = vmatprep.subr.mxu0 %v328
  %1042 = vmatpush1.msra.mxu0 %v327
  %1043 = vmatprep.subr.mxu0 %v330
  %1044 = vmatpush1.msra.mxu0 %v329
  %1045 = vmatprep.subr.mxu0 %v332
  %1046 = vmatpush1.msra.mxu0 %v331
  %1047 = vmatprep.subr.mxu0 %v334
  %1048 = vmatpush1.msra.mxu0 %v333
  %1049 = vmatprep.subr.mxu0 %v336
  %1050 = vmatpush1.msra.mxu0 %v335
  %1051 = vmatprep.subr.mxu0 %v338
  %1052 = vmatpush1.msra.mxu0 %v337
  %1053 = vmatprep.subr.mxu0 %v340
  %1054 = vmatpush1.msra.mxu0 %v339
  %1055 = vmatprep.subr.mxu0 %v342
  %1056 = vmatpush1.msra.mxu0 %v341
  %1057 = vmatprep.subr.mxu0 %v344
  %1058 = vmatpush1.msra.mxu0 %v343
  %1059 = vmatprep.subr.mxu0 %v346
  %1060 = vmatpush1.msra.mxu0 %v345
  %1061 = vmatprep.subr.mxu0 %v348
  %1062 = vmatpush1.msra.mxu0 %v347
  %1063 = vmatprep.subr.mxu0 %v350
  %1064 = vmatpush1.msra.mxu0 %v349
  %1065 = vmatprep.subr.mxu0 %v352
  %1066 = vmatpush1.msra.mxu0 %v351
  %1067 = vmatprep.subr.mxu0 0.0
  %1068 = vmatpush1.msra.mxu0 0.0
  %1069 = vmatprep.subr.mxu0 0.0
  %1070 = vmatpush1.msra.mxu0 0.0
  %1071 = vmatprep.subr.mxu0 0.0
  %1072 = vmatpush1.msra.mxu0 0.0
  %1073 = vmatprep.subr.mxu0 0.0
  %1074 = vmatpush1.msra.mxu0 0.0
  %1075 = vmatprep.subr.mxu0 0.0
  %1076 = vmatpush1.msra.mxu0 0.0
  %1077 = vmatprep.subr.mxu0 0.0
  %1078 = vmatpush1.msra.mxu0 0.0
  %1079 = vmatprep.subr.mxu0 0.0
  %1080 = vmatpush1.msra.mxu0 0.0
  %1081 = vmatprep.subr.mxu0 0.0
  %1082 = vmatpush1.msra.mxu0 0.0
  %1083 = vmatprep.subr.mxu0 0.0
  %1084 = vmatpush1.msra.mxu0 0.0
  %1085 = vmatprep.subr.mxu0 0.0
  %1086 = vmatpush1.msra.mxu0 0.0
  %1087 = vmatprep.subr.mxu0 0.0
  %1088 = vmatpush1.msra.mxu0 0.0
  %1089 = vmatprep.subr.mxu0 0.0
  %1090 = vmatpush1.msra.mxu0 0.0
  %1091 = vmatprep.subr.mxu0 0.0
  %1092 = vmatpush1.msra.mxu0 0.0
  %1093 = vmatprep.subr.mxu0 0.0
  %1094 = vmatpush1.msra.mxu0 0.0
  %1095 = vmatprep.subr.mxu0 0.0
  %1096 = vmatpush1.msra.mxu0 0.0
  %1097 = vmatprep.subr.mxu0 0.0
  %1098 = vmatpush1.msra.mxu0 0.0
  %1099 = vmatprep.mubr.f32.mxu0 0.0
  %1100 = vmatmul.mubr.f32.gmra.mrb[0].mxu0 %v1028
  %v1101 = vpop.f32.mrb[0].mxu0
  %v1102 = vadd.f32 0.0, %v1101
  %v1103 = vpop.f32.mrb[0].mxu0
  %v1104 = vadd.f32 0.0, %v1103
  %1105 = vdwg.mxu0
  %v1106 = vadd.f32 %v1032, %v1102
  %v1107 = vadd.f32 %v1033, %v1104
  %v1108 = vxor.u32 %v1106, 2147483648
  %v1109 = vxor.u32 %v1107, 2147483648
  %v1110 = vmul.f32 %v1108, 1.442695
  %v1111 = vpow.pop %v1110
  %v1112 = vmul.f32 %v1109, 1.442695
  %v1113 = vpow.pop %v1112
  %v1114 = vadd.f32 %v1111, 1.0
  %v1115 = vadd.f32 %v1113, 1.0
  %v1116 = vrcp.pop %v1114
  %v1117 = vmul.f32 1.0, %v1116
  %v1118 = vrcp.pop %v1115
  %v1119 = vmul.f32 1.0, %v1118
  %v1120 = vmul.f32 %v1117, %v1028
  %v1121 = vadd.f32 %v1034, %v1120
  %v1122 = vtanh.pop %v1121
  %v1123 = vsub.f32 %v1028, %v1122
  %v1124 = vmul.f32 %v1119, %v1123
  %v1125 = vadd.f32 %v1122, %v1124
  %s1126 = scalar_lea.vmem %s4, 56
  %1127 = vst [vmem:[%s1126] sm:$0xff] %v1125
  %1128 = vst [vmem:[#allocation2] sm:$0xff] %v1125
  // Predicated region
  $region22: #{gru_forward.2} parent=0 // pred_check
    _
  $region23: #{gru_forward.2} parent=0 // pred_check_branch
    %1130 = sbr.rel (0) target = $region25
  $region24: #{gru_forward.2} parent=0 // pred_region
    _
  $region25: #{gru_forward.2} parent=0 // pred_fallthru
    _
  // Predicated region
  $region26: #{gru_forward.2} parent=0 // pred_check
    _
  $region27: #{gru_forward.2} parent=0 // pred_check_branch
    %1132 = sbr.rel (0) target = $region29
  $region28: #{gru_forward.2} parent=0 // pred_region
    _
  $region29: #{gru_forward.2} parent=0 // pred_fallthru
    _

</llo_original>
